<compile_context>
chip_gen: v6e
topology: v6e:2x2x1
jax: 0.10.0
libtpu: 0.0.40
codegen_flags: <defaults>
</compile_context>

<pallas_src>
import jax
import jax.numpy as jnp
import numpy as np
from jax.experimental import pallas as pl
from jax.experimental.pallas import tpu as pltpu

# ----------------------------- configuration -------------------------------
B = 2          # batch
L = 16         # sequence length
D_MODEL = 32   # model dim (input / output of NextItNet)
D_LAYER = 64   # residual channels (d_layer)
K = 3          # conv kernel size
DILATIONS = (1, 2, 4)
NB = len(DILATIONS)
EPS = 1e-8
N = B * L      # flattened (batch*seq) rows
OUT_PAD = 128  # lane-padded output width (>= D_MODEL, multiple of 128)


def _shift(j, d):
    # Left shift (in sequence positions) of conv tap j at dilation d.
    return (K - 1 - j) * d


_ALL_SHIFTS = [_shift(j, dil * (1 + half))
               for dil in DILATIONS for half in range(2) for j in range(K)]
LIVE_SHIFTS = tuple(sorted({s for s in _ALL_SHIFTS if 0 < s < L}))
# The roll+mask trick requires batch-major flattening (row r -> (r // L, r % L))
# and every *live* tap shift strictly < L; dead taps are zeroed host-side.
assert all(0 < s < L for s in LIVE_SHIFTS)
assert N % 8 == 0


# ------------------------------- kernel ------------------------------------
def nextitnet_kernel(x_ref, win_ref, bin_ref, cw_ref, cb_ref, lng_ref, lnb_ref,
                     a_ref, wout_ref, bout_ref, mom_ref, o_ref):
    # x_ref: (B*L, D_MODEL) -- whole batch resident, single kernel invocation.
    x = x_ref[...]

    # Hoisted causal masks: one (pos >= shift) mask per distinct live shift,
    # reused by every block/half.
    pos = jax.lax.broadcasted_iota(jnp.int32, (N, D_LAYER), 0) % L
    masks = {s: (pos >= s).astype(jnp.float32) for s in LIVE_SHIFTS}

    mom_rhs = mom_ref[...]      # (2*D_LAYER, 2*D_LAYER) block-averaging matrix

    # input projection: Linear(d_model -> d_layer)
    h = jnp.dot(x, win_ref[...], preferred_element_type=jnp.float32) + bin_ref[...]

    # residual blocks (statically unrolled over the dilation list)
    for i, dil in enumerate(DILATIONS):
        block_in = h
        cur = block_in
        for half in range(2):                      # conv1 (dil), conv2 (2*dil)
            d = dil * (1 + half)

            # ---- causal dilated conv: all K taps fused into ONE matmul ----
            parts = []
            for j in range(K):
                s = _shift(j, d)
                if s == 0:
                    parts.append(cur)              # zero-shift tap: no roll/mask
                elif s < L:
                    parts.append(masks[s] * pltpu.roll(cur, shift=s, axis=0))
                else:
                    # Dead tap (reads only left padding); its weight block was
                    # zeroed host-side, so this contributes exactly zero.
                    parts.append(cur)
            lhs = jnp.concatenate(parts, axis=-1)               # (N, K*D_LAYER)
            acc = (jnp.dot(lhs, cw_ref[i, half],
                           preferred_element_type=jnp.float32)
                   + cb_ref[i, half])                            # (N, D_LAYER)

            # ---- LayerNorm: both moments in ONE MXU dot (off the XLU) ----
            stacked = jnp.concatenate([acc, acc * acc], axis=-1)   # (N, 2*D_LAYER)
            moments = jnp.dot(stacked, mom_rhs,
                              preferred_element_type=jnp.float32)  # (N, 2*D_LAYER)
            mean = moments[:, :D_LAYER]          # mean, broadcast across lanes
            meansq = moments[:, D_LAYER:]        # E[x^2], broadcast across lanes
            var = jnp.maximum(meansq - mean * mean, 0.0)
            normed = (acc - mean) * jax.lax.rsqrt(var + EPS)
            normed = normed * lng_ref[i, half] + lnb_ref[i, half]
            cur = jnp.maximum(normed, 0.0)       # ReLU

        # scaled residual (enable_res_parameter=True): a * out2 + x
        h = a_ref[i] * cur + block_in

    # output projection (w_out lane-padded to OUT_PAD -> unmasked stores)
    o_ref[...] = (jnp.dot(h, wout_ref[...], preferred_element_type=jnp.float32)
                  + bout_ref[...])


def nextitnet_pallas(x, params):
    (w_in, b_in, conv_w, conv_b, ln_g, ln_b, a, w_out, b_out) = params

    # ---- host-side packing (layout plumbing, not compute hoisting) ----
    # Zero weight blocks of taps that only ever see left padding (shift >= L),
    # then stack the K tap matrices row-wise into one (K*D_LAYER, D_LAYER) RHS.
    live = np.ones((NB, 2, K, 1, 1), np.float32)
    for i, dil in enumerate(DILATIONS):
        for half in range(2):
            d = dil * (1 + half)
            for j in range(K):
                if _shift(j, d) >= L:
                    live[i, half, j] = 0.0
    conv_w_f = (conv_w * jnp.asarray(live)).reshape(NB, 2, K * D_LAYER, D_LAYER)
    conv_b_r = conv_b.reshape(NB, 2, 1, D_LAYER)
    ln_g_r = ln_g.reshape(NB, 2, 1, D_LAYER)
    ln_b_r = ln_b.reshape(NB, 2, 1, D_LAYER)
    w_out_p = jnp.zeros((D_LAYER, OUT_PAD), jnp.float32).at[:, :D_MODEL].set(w_out)
    b_out_p = jnp.zeros((1, OUT_PAD), jnp.float32).at[:, :D_MODEL].set(b_out)

    # Block-diagonal averaging matrix: [acc | acc^2] @ mom -> [mean | E[x^2]],
    # each already broadcast across all D_LAYER lanes.
    mom = np.zeros((2 * D_LAYER, 2 * D_LAYER), np.float32)
    mom[:D_LAYER, :D_LAYER] = 1.0 / D_LAYER
    mom[D_LAYER:, D_LAYER:] = 1.0 / D_LAYER
    mom_rhs = jnp.asarray(mom)

    x2d = x.reshape(N, D_MODEL)   # batch-major flattening: row r -> (r//L, r%L)

    operands = (x2d, w_in, b_in, conv_w_f, conv_b_r, ln_g_r, ln_b_r, a,
                w_out_p, b_out_p, mom_rhs)

    flops = (2 * N * D_MODEL * D_LAYER                          # input projection
             + 2 * N * D_LAYER * OUT_PAD                        # output projection
             + 2 * NB * 2 * N * (K * D_LAYER) * D_LAYER         # fused conv taps
             + 2 * NB * 2 * N * (2 * D_LAYER) * (2 * D_LAYER))  # LN moments
    transcendentals = 2 * NB * N                                # one rsqrt per LN row
    bytes_accessed = (sum(int(np.prod(t.shape)) * t.dtype.itemsize for t in operands)
                      + N * OUT_PAD * 4)

    vmem = pl.BlockSpec(memory_space=pltpu.MemorySpace.VMEM)
    smem = pl.BlockSpec(memory_space=pltpu.MemorySpace.SMEM)

    out2d = pl.pallas_call(
        nextitnet_kernel,
        out_shape=jax.ShapeDtypeStruct((N, OUT_PAD), jnp.float32),
        in_specs=[vmem, vmem, vmem, vmem, vmem, vmem, vmem, smem, vmem, vmem, vmem],
        out_specs=vmem,
        cost_estimate=pl.CostEstimate(
            flops=flops, transcendentals=transcendentals,
            bytes_accessed=bytes_accessed),
    )(*operands)
    return out2d[:, :D_MODEL].reshape(B, L, D_MODEL)


# --------------------------- pure-JAX reference -----------------------------
def nextitnet_ref(x, params):
    (w_in, b_in, conv_w, conv_b, ln_g, ln_b, a, w_out, b_out) = params
    h = x @ w_in + b_in
    for i, dil in enumerate(DILATIONS):
        block_in = h
        cur = block_in
        for half in range(2):
            d = dil * (1 + half)
            pad = (K - 1) * d
            xp = jnp.pad(cur, ((0, 0), (pad, 0), (0, 0)))
            acc = jnp.broadcast_to(conv_b[i, half], (B, L, D_LAYER)).astype(jnp.float32)
            for j in range(K):
                acc = acc + jnp.einsum('blc,cd->bld',
                                       xp[:, j * d:j * d + L, :], conv_w[i, half, j])
            mean = acc.mean(-1, keepdims=True)
            var = ((acc - mean) ** 2).mean(-1, keepdims=True)
            normed = (acc - mean) / jnp.sqrt(var + EPS) * ln_g[i, half] + ln_b[i, half]
            cur = jnp.maximum(normed, 0.0)
        h = a[i] * cur + block_in
    return h @ w_out + b_out


# --------------------------------- main -------------------------------------
if __name__ == "__main__":
    key = jax.random.PRNGKey(0)
    ks = jax.random.split(key, 12)
    scale = 0.1

    w_in = (jax.random.normal(ks[0], (D_MODEL, D_LAYER)) * scale).astype(jnp.float32)
    b_in = (jax.random.normal(ks[1], (1, D_LAYER)) * scale).astype(jnp.float32)
    conv_w = (jax.random.normal(ks[2], (NB, 2, K, D_LAYER, D_LAYER)) * scale).astype(jnp.float32)
    conv_b = (jax.random.normal(ks[3], (NB, 2, D_LAYER)) * scale).astype(jnp.float32)
    ln_g = (1.0 + 0.1 * jax.random.normal(ks[4], (NB, 2, D_LAYER))).astype(jnp.float32)
    ln_b = (0.1 * jax.random.normal(ks[5], (NB, 2, D_LAYER))).astype(jnp.float32)
    a = (0.5 + 0.1 * jax.random.normal(ks[6], (NB,))).astype(jnp.float32)  # res-scale params
    w_out = (jax.random.normal(ks[7], (D_LAYER, D_MODEL)) * scale).astype(jnp.float32)
    b_out = (jax.random.normal(ks[8], (1, D_MODEL)) * scale).astype(jnp.float32)

    params = (w_in, b_in, conv_w, conv_b, ln_g, ln_b, a, w_out, b_out)

    x = jax.random.normal(ks[9], (B, L, D_MODEL), dtype=jnp.float32)

    out = nextitnet_pallas(x, params)
    out = jax.block_until_ready(out)

    ref = jax.block_until_ready(nextitnet_ref(x, params))
    if not np.allclose(np.asarray(out), np.asarray(ref), rtol=1e-4, atol=1e-4):
        raise AssertionError("Pallas kernel output does not match reference")

    print("KERNEL_OK")
</pallas_src>

<mosaic_0001>
module attributes {stable_mosaic.version = 11 : i64} {
  func.func @nextitnet_kernel(%arg0: memref<32x32xf32, #tpu.memory_space<vmem>>, %arg1: memref<32x64xf32, #tpu.memory_space<vmem>>, %arg2: memref<1x64xf32, #tpu.memory_space<vmem>>, %arg3: memref<3x2x192x64xf32, #tpu.memory_space<vmem>>, %arg4: memref<3x2x1x64xf32, #tpu.memory_space<vmem>>, %arg5: memref<3x2x1x64xf32, #tpu.memory_space<vmem>>, %arg6: memref<3x2x1x64xf32, #tpu.memory_space<vmem>>, %arg7: memref<3xf32, #tpu.memory_space<smem>>, %arg8: memref<64x128xf32, #tpu.memory_space<vmem>>, %arg9: memref<1x128xf32, #tpu.memory_space<vmem>>, %arg10: memref<128x128xf32, #tpu.memory_space<vmem>>, %arg11: memref<32x128xf32, #tpu.memory_space<vmem>>) attributes {dimension_semantics = [], scalar_prefetch = 0 : i64, scratch_operands = 0 : i64, tpu.core_type = #tpu.core_type<tc>} {
    %c0 = arith.constant 0 : index
    %c0_0 = arith.constant 0 : index
    %0 = vector.load %arg0[%c0, %c0_0] : memref<32x32xf32, #tpu.memory_space<vmem>>, vector<32x32xf32>
    %1 = tpu.iota {dimensions = array<i32: 0>} : vector<32x64xi32>
    %c16_i32 = arith.constant 16 : i32
    %c0_i32 = arith.constant 0 : i32
    %2 = arith.cmpi eq, %c16_i32, %c0_i32 : i32
    %c1_i32 = arith.constant 1 : i32
    %3 = arith.select %2, %c1_i32, %c16_i32 : i32
    %4 = vector.broadcast %3 : i32 to vector<32x64xi32>
    %5 = arith.remsi %1, %4 : vector<32x64xi32>
    %c0_i32_1 = arith.constant 0 : i32
    %6 = vector.broadcast %c0_i32_1 : i32 to vector<32x64xi32>
    %7 = arith.cmpi ne, %5, %6 : vector<32x64xi32>
    %c0_i32_2 = arith.constant 0 : i32
    %8 = vector.broadcast %c0_i32_2 : i32 to vector<32x64xi32>
    %9 = arith.cmpi slt, %5, %8 : vector<32x64xi32>
    %c0_i32_3 = arith.constant 0 : i32
    %10 = arith.cmpi slt, %3, %c0_i32_3 : i32
    %11 = vector.broadcast %10 : i1 to vector<32x64xi1>
    %12 = vector.broadcast %11 : vector<32x64xi1> to vector<32x64xi1>
    %13 = arith.xori %9, %12 : vector<32x64xi1>
    %14 = arith.andi %13, %7 : vector<32x64xi1>
    %15 = vector.broadcast %3 : i32 to vector<32x64xi32>
    %16 = arith.addi %5, %15 : vector<32x64xi32>
    %17 = arith.select %14, %16, %5 : vector<32x64xi1>, vector<32x64xi32>
    %c1_i32_4 = arith.constant 1 : i32
    %18 = vector.broadcast %c1_i32_4 : i32 to vector<32x64xi32>
    %19 = arith.cmpi sge, %17, %18 : vector<32x64xi32>
    %20 = arith.extui %19 : vector<32x64xi1> to vector<32x64xi32>
    %21 = arith.sitofp %20 : vector<32x64xi32> to vector<32x64xf32>
    %c2_i32 = arith.constant 2 : i32
    %22 = vector.broadcast %c2_i32 : i32 to vector<32x64xi32>
    %23 = arith.cmpi sge, %17, %22 : vector<32x64xi32>
    %24 = arith.extui %23 : vector<32x64xi1> to vector<32x64xi32>
    %25 = arith.sitofp %24 : vector<32x64xi32> to vector<32x64xf32>
    %c4_i32 = arith.constant 4 : i32
    %26 = vector.broadcast %c4_i32 : i32 to vector<32x64xi32>
    %27 = arith.cmpi sge, %17, %26 : vector<32x64xi32>
    %28 = arith.extui %27 : vector<32x64xi1> to vector<32x64xi32>
    %29 = arith.sitofp %28 : vector<32x64xi32> to vector<32x64xf32>
    %c8_i32 = arith.constant 8 : i32
    %30 = vector.broadcast %c8_i32 : i32 to vector<32x64xi32>
    %31 = arith.cmpi sge, %17, %30 : vector<32x64xi32>
    %32 = arith.extui %31 : vector<32x64xi1> to vector<32x64xi32>
    %33 = arith.sitofp %32 : vector<32x64xi32> to vector<32x64xf32>
    %c0_5 = arith.constant 0 : index
    %c0_6 = arith.constant 0 : index
    %34 = vector.load %arg10[%c0_5, %c0_6] : memref<128x128xf32, #tpu.memory_space<vmem>>, vector<128x128xf32>
    %c0_7 = arith.constant 0 : index
    %c0_8 = arith.constant 0 : index
    %35 = vector.load %arg1[%c0_7, %c0_8] : memref<32x64xf32, #tpu.memory_space<vmem>>, vector<32x64xf32>
    %cst = arith.constant dense<0.000000e+00> : vector<32x64xf32>
    %36 = tpu.matmul %0, %35, %cst {dimension_numbers = #tpu.dot_dimension_numbers<[1], [0], [0], [1], [0, 0, 1, 1], [], []>} : vector<32x32xf32>, vector<32x64xf32>, vector<32x64xf32> -> vector<32x64xf32>
    %c0_9 = arith.constant 0 : index
    %c0_10 = arith.constant 0 : index
    %37 = vector.load %arg2[%c0_9, %c0_10] : memref<1x64xf32, #tpu.memory_space<vmem>>, vector<1x64xf32>
    %38 = vector.broadcast %37 : vector<1x64xf32> to vector<32x64xf32>
    %39 = arith.addf %36, %38 : vector<32x64xf32>
    %c2_i32_11 = arith.constant 2 : i32
    %40 = tpu.dynamic_rotate %39 by %c2_i32_11 dim 0 : vector<32x64xf32>, i32 -> vector<32x64xf32>
    %41 = arith.mulf %25, %40 : vector<32x64xf32>
    %c1_i32_12 = arith.constant 1 : i32
    %42 = tpu.dynamic_rotate %39 by %c1_i32_12 dim 0 : vector<32x64xf32>, i32 -> vector<32x64xf32>
    %43 = arith.mulf %21, %42 : vector<32x64xf32>
    %44 = tpu.concatenate %41, %43, %39 in 1 : vector<32x64xf32>, vector<32x64xf32>, vector<32x64xf32> -> vector<32x192xf32>
    %c0_13 = arith.constant 0 : index
    %c0_14 = arith.constant 0 : index
    %c0_15 = arith.constant 0 : index
    %c0_16 = arith.constant 0 : index
    %45 = vector.load %arg3[%c0_13, %c0_14, %c0_15, %c0_16] : memref<3x2x192x64xf32, #tpu.memory_space<vmem>>, vector<1x1x192x64xf32>
    %46 = vector.shape_cast %45 : vector<1x1x192x64xf32> to vector<192x64xf32>
    %cst_17 = arith.constant dense<0.000000e+00> : vector<32x64xf32>
    %47 = tpu.matmul %44, %46, %cst_17 {dimension_numbers = #tpu.dot_dimension_numbers<[1], [0], [0], [1], [0, 0, 1, 1], [], []>} : vector<32x192xf32>, vector<192x64xf32>, vector<32x64xf32> -> vector<32x64xf32>
    %c0_18 = arith.constant 0 : index
    %c0_19 = arith.constant 0 : index
    %c0_20 = arith.constant 0 : index
    %c0_21 = arith.constant 0 : index
    %48 = vector.load %arg4[%c0_18, %c0_19, %c0_20, %c0_21] : memref<3x2x1x64xf32, #tpu.memory_space<vmem>>, vector<1x1x1x64xf32>
    %49 = vector.shape_cast %48 : vector<1x1x1x64xf32> to vector<1x64xf32>
    %50 = vector.broadcast %49 : vector<1x64xf32> to vector<32x64xf32>
    %51 = arith.addf %47, %50 : vector<32x64xf32>
    %52 = arith.mulf %51, %51 : vector<32x64xf32>
    %53 = tpu.concatenate %51, %52 in 1 : vector<32x64xf32>, vector<32x64xf32> -> vector<32x128xf32>
    %cst_22 = arith.constant dense<0.000000e+00> : vector<32x128xf32>
    %54 = tpu.matmul %53, %34, %cst_22 {dimension_numbers = #tpu.dot_dimension_numbers<[1], [0], [0], [1], [0, 0, 1, 1], [], []>} : vector<32x128xf32>, vector<128x128xf32>, vector<32x128xf32> -> vector<32x128xf32>
    %55 = vector.extract_strided_slice %54 {offsets = [0, 0], sizes = [32, 64], strides = [1, 1]} : vector<32x128xf32> to vector<32x64xf32>
    %56 = vector.extract_strided_slice %54 {offsets = [0, 64], sizes = [32, 64], strides = [1, 1]} : vector<32x128xf32> to vector<32x64xf32>
    %57 = arith.mulf %55, %55 : vector<32x64xf32>
    %58 = arith.subf %56, %57 : vector<32x64xf32>
    %cst_23 = arith.constant 0.000000e+00 : f32
    %59 = vector.broadcast %cst_23 : f32 to vector<32x64xf32>
    %60 = arith.maximumf %58, %59 : vector<32x64xf32>
    %61 = arith.subf %51, %55 : vector<32x64xf32>
    %cst_24 = arith.constant 9.99999993E-9 : f32
    %62 = vector.broadcast %cst_24 : f32 to vector<32x64xf32>
    %63 = arith.addf %60, %62 : vector<32x64xf32>
    %64 = math.rsqrt %63 : vector<32x64xf32>
    %65 = arith.mulf %61, %64 : vector<32x64xf32>
    %c0_25 = arith.constant 0 : index
    %c0_26 = arith.constant 0 : index
    %c0_27 = arith.constant 0 : index
    %c0_28 = arith.constant 0 : index
    %66 = vector.load %arg5[%c0_25, %c0_26, %c0_27, %c0_28] : memref<3x2x1x64xf32, #tpu.memory_space<vmem>>, vector<1x1x1x64xf32>
    %67 = vector.shape_cast %66 : vector<1x1x1x64xf32> to vector<1x64xf32>
    %68 = vector.broadcast %67 : vector<1x64xf32> to vector<32x64xf32>
    %69 = arith.mulf %65, %68 : vector<32x64xf32>
    %c0_29 = arith.constant 0 : index
    %c0_30 = arith.constant 0 : index
    %c0_31 = arith.constant 0 : index
    %c0_32 = arith.constant 0 : index
    %70 = vector.load %arg6[%c0_29, %c0_30, %c0_31, %c0_32] : memref<3x2x1x64xf32, #tpu.memory_space<vmem>>, vector<1x1x1x64xf32>
    %71 = vector.shape_cast %70 : vector<1x1x1x64xf32> to vector<1x64xf32>
    %72 = vector.broadcast %71 : vector<1x64xf32> to vector<32x64xf32>
    %73 = arith.addf %69, %72 : vector<32x64xf32>
    %cst_33 = arith.constant 0.000000e+00 : f32
    %74 = vector.broadcast %cst_33 : f32 to vector<32x64xf32>
    %75 = arith.maximumf %73, %74 : vector<32x64xf32>
    %c4_i32_34 = arith.constant 4 : i32
    %76 = tpu.dynamic_rotate %75 by %c4_i32_34 dim 0 : vector<32x64xf32>, i32 -> vector<32x64xf32>
    %77 = arith.mulf %29, %76 : vector<32x64xf32>
    %c2_i32_35 = arith.constant 2 : i32
    %78 = tpu.dynamic_rotate %75 by %c2_i32_35 dim 0 : vector<32x64xf32>, i32 -> vector<32x64xf32>
    %79 = arith.mulf %25, %78 : vector<32x64xf32>
    %80 = tpu.concatenate %77, %79, %75 in 1 : vector<32x64xf32>, vector<32x64xf32>, vector<32x64xf32> -> vector<32x192xf32>
    %c0_36 = arith.constant 0 : index
    %c1 = arith.constant 1 : index
    %c0_37 = arith.constant 0 : index
    %c0_38 = arith.constant 0 : index
    %81 = vector.load %arg3[%c0_36, %c1, %c0_37, %c0_38] : memref<3x2x192x64xf32, #tpu.memory_space<vmem>>, vector<1x1x192x64xf32>
    %82 = vector.shape_cast %81 : vector<1x1x192x64xf32> to vector<192x64xf32>
    %cst_39 = arith.constant dense<0.000000e+00> : vector<32x64xf32>
    %83 = tpu.matmul %80, %82, %cst_39 {dimension_numbers = #tpu.dot_dimension_numbers<[1], [0], [0], [1], [0, 0, 1, 1], [], []>} : vector<32x192xf32>, vector<192x64xf32>, vector<32x64xf32> -> vector<32x64xf32>
    %c0_40 = arith.constant 0 : index
    %c1_41 = arith.constant 1 : index
    %c0_42 = arith.constant 0 : index
    %c0_43 = arith.constant 0 : index
    %84 = vector.load %arg4[%c0_40, %c1_41, %c0_42, %c0_43] : memref<3x2x1x64xf32, #tpu.memory_space<vmem>>, vector<1x1x1x64xf32>
    %85 = vector.shape_cast %84 : vector<1x1x1x64xf32> to vector<1x64xf32>
    %86 = vector.broadcast %85 : vector<1x64xf32> to vector<32x64xf32>
    %87 = arith.addf %83, %86 : vector<32x64xf32>
    %88 = arith.mulf %87, %87 : vector<32x64xf32>
    %89 = tpu.concatenate %87, %88 in 1 : vector<32x64xf32>, vector<32x64xf32> -> vector<32x128xf32>
    %cst_44 = arith.constant dense<0.000000e+00> : vector<32x128xf32>
    %90 = tpu.matmul %89, %34, %cst_44 {dimension_numbers = #tpu.dot_dimension_numbers<[1], [0], [0], [1], [0, 0, 1, 1], [], []>} : vector<32x128xf32>, vector<128x128xf32>, vector<32x128xf32> -> vector<32x128xf32>
    %91 = vector.extract_strided_slice %90 {offsets = [0, 0], sizes = [32, 64], strides = [1, 1]} : vector<32x128xf32> to vector<32x64xf32>
    %92 = vector.extract_strided_slice %90 {offsets = [0, 64], sizes = [32, 64], strides = [1, 1]} : vector<32x128xf32> to vector<32x64xf32>
    %93 = arith.mulf %91, %91 : vector<32x64xf32>
    %94 = arith.subf %92, %93 : vector<32x64xf32>
    %cst_45 = arith.constant 0.000000e+00 : f32
    %95 = vector.broadcast %cst_45 : f32 to vector<32x64xf32>
    %96 = arith.maximumf %94, %95 : vector<32x64xf32>
    %97 = arith.subf %87, %91 : vector<32x64xf32>
    %cst_46 = arith.constant 9.99999993E-9 : f32
    %98 = vector.broadcast %cst_46 : f32 to vector<32x64xf32>
    %99 = arith.addf %96, %98 : vector<32x64xf32>
    %100 = math.rsqrt %99 : vector<32x64xf32>
    %101 = arith.mulf %97, %100 : vector<32x64xf32>
    %c0_47 = arith.constant 0 : index
    %c1_48 = arith.constant 1 : index
    %c0_49 = arith.constant 0 : index
    %c0_50 = arith.constant 0 : index
    %102 = vector.load %arg5[%c0_47, %c1_48, %c0_49, %c0_50] : memref<3x2x1x64xf32, #tpu.memory_space<vmem>>, vector<1x1x1x64xf32>
    %103 = vector.shape_cast %102 : vector<1x1x1x64xf32> to vector<1x64xf32>
    %104 = vector.broadcast %103 : vector<1x64xf32> to vector<32x64xf32>
    %105 = arith.mulf %101, %104 : vector<32x64xf32>
    %c0_51 = arith.constant 0 : index
    %c1_52 = arith.constant 1 : index
    %c0_53 = arith.constant 0 : index
    %c0_54 = arith.constant 0 : index
    %106 = vector.load %arg6[%c0_51, %c1_52, %c0_53, %c0_54] : memref<3x2x1x64xf32, #tpu.memory_space<vmem>>, vector<1x1x1x64xf32>
    %107 = vector.shape_cast %106 : vector<1x1x1x64xf32> to vector<1x64xf32>
    %108 = vector.broadcast %107 : vector<1x64xf32> to vector<32x64xf32>
    %109 = arith.addf %105, %108 : vector<32x64xf32>
    %cst_55 = arith.constant 0.000000e+00 : f32
    %110 = vector.broadcast %cst_55 : f32 to vector<32x64xf32>
    %111 = arith.maximumf %109, %110 : vector<32x64xf32>
    %c0_56 = arith.constant 0 : index
    %112 = memref.load %arg7[%c0_56] : memref<3xf32, #tpu.memory_space<smem>>
    %113 = vector.broadcast %112 : f32 to vector<32x64xf32>
    %114 = arith.mulf %113, %111 : vector<32x64xf32>
    %115 = arith.addf %114, %39 : vector<32x64xf32>
    %c4_i32_57 = arith.constant 4 : i32
    %116 = tpu.dynamic_rotate %115 by %c4_i32_57 dim 0 : vector<32x64xf32>, i32 -> vector<32x64xf32>
    %117 = arith.mulf %29, %116 : vector<32x64xf32>
    %c2_i32_58 = arith.constant 2 : i32
    %118 = tpu.dynamic_rotate %115 by %c2_i32_58 dim 0 : vector<32x64xf32>, i32 -> vector<32x64xf32>
    %119 = arith.mulf %25, %118 : vector<32x64xf32>
    %120 = tpu.concatenate %117, %119, %115 in 1 : vector<32x64xf32>, vector<32x64xf32>, vector<32x64xf32> -> vector<32x192xf32>
    %c1_59 = arith.constant 1 : index
    %c0_60 = arith.constant 0 : index
    %c0_61 = arith.constant 0 : index
    %c0_62 = arith.constant 0 : index
    %121 = vector.load %arg3[%c1_59, %c0_60, %c0_61, %c0_62] : memref<3x2x192x64xf32, #tpu.memory_space<vmem>>, vector<1x1x192x64xf32>
    %122 = vector.shape_cast %121 : vector<1x1x192x64xf32> to vector<192x64xf32>
    %cst_63 = arith.constant dense<0.000000e+00> : vector<32x64xf32>
    %123 = tpu.matmul %120, %122, %cst_63 {dimension_numbers = #tpu.dot_dimension_numbers<[1], [0], [0], [1], [0, 0, 1, 1], [], []>} : vector<32x192xf32>, vector<192x64xf32>, vector<32x64xf32> -> vector<32x64xf32>
    %c1_64 = arith.constant 1 : index
    %c0_65 = arith.constant 0 : index
    %c0_66 = arith.constant 0 : index
    %c0_67 = arith.constant 0 : index
    %124 = vector.load %arg4[%c1_64, %c0_65, %c0_66, %c0_67] : memref<3x2x1x64xf32, #tpu.memory_space<vmem>>, vector<1x1x1x64xf32>
    %125 = vector.shape_cast %124 : vector<1x1x1x64xf32> to vector<1x64xf32>
    %126 = vector.broadcast %125 : vector<1x64xf32> to vector<32x64xf32>
    %127 = arith.addf %123, %126 : vector<32x64xf32>
    %128 = arith.mulf %127, %127 : vector<32x64xf32>
    %129 = tpu.concatenate %127, %128 in 1 : vector<32x64xf32>, vector<32x64xf32> -> vector<32x128xf32>
    %cst_68 = arith.constant dense<0.000000e+00> : vector<32x128xf32>
    %130 = tpu.matmul %129, %34, %cst_68 {dimension_numbers = #tpu.dot_dimension_numbers<[1], [0], [0], [1], [0, 0, 1, 1], [], []>} : vector<32x128xf32>, vector<128x128xf32>, vector<32x128xf32> -> vector<32x128xf32>
    %131 = vector.extract_strided_slice %130 {offsets = [0, 0], sizes = [32, 64], strides = [1, 1]} : vector<32x128xf32> to vector<32x64xf32>
    %132 = vector.extract_strided_slice %130 {offsets = [0, 64], sizes = [32, 64], strides = [1, 1]} : vector<32x128xf32> to vector<32x64xf32>
    %133 = arith.mulf %131, %131 : vector<32x64xf32>
    %134 = arith.subf %132, %133 : vector<32x64xf32>
    %cst_69 = arith.constant 0.000000e+00 : f32
    %135 = vector.broadcast %cst_69 : f32 to vector<32x64xf32>
    %136 = arith.maximumf %134, %135 : vector<32x64xf32>
    %137 = arith.subf %127, %131 : vector<32x64xf32>
    %cst_70 = arith.constant 9.99999993E-9 : f32
    %138 = vector.broadcast %cst_70 : f32 to vector<32x64xf32>
    %139 = arith.addf %136, %138 : vector<32x64xf32>
    %140 = math.rsqrt %139 : vector<32x64xf32>
    %141 = arith.mulf %137, %140 : vector<32x64xf32>
    %c1_71 = arith.constant 1 : index
    %c0_72 = arith.constant 0 : index
    %c0_73 = arith.constant 0 : index
    %c0_74 = arith.constant 0 : index
    %142 = vector.load %arg5[%c1_71, %c0_72, %c0_73, %c0_74] : memref<3x2x1x64xf32, #tpu.memory_space<vmem>>, vector<1x1x1x64xf32>
    %143 = vector.shape_cast %142 : vector<1x1x1x64xf32> to vector<1x64xf32>
    %144 = vector.broadcast %143 : vector<1x64xf32> to vector<32x64xf32>
    %145 = arith.mulf %141, %144 : vector<32x64xf32>
    %c1_75 = arith.constant 1 : index
    %c0_76 = arith.constant 0 : index
    %c0_77 = arith.constant 0 : index
    %c0_78 = arith.constant 0 : index
    %146 = vector.load %arg6[%c1_75, %c0_76, %c0_77, %c0_78] : memref<3x2x1x64xf32, #tpu.memory_space<vmem>>, vector<1x1x1x64xf32>
    %147 = vector.shape_cast %146 : vector<1x1x1x64xf32> to vector<1x64xf32>
    %148 = vector.broadcast %147 : vector<1x64xf32> to vector<32x64xf32>
    %149 = arith.addf %145, %148 : vector<32x64xf32>
    %cst_79 = arith.constant 0.000000e+00 : f32
    %150 = vector.broadcast %cst_79 : f32 to vector<32x64xf32>
    %151 = arith.maximumf %149, %150 : vector<32x64xf32>
    %c8_i32_80 = arith.constant 8 : i32
    %152 = tpu.dynamic_rotate %151 by %c8_i32_80 dim 0 : vector<32x64xf32>, i32 -> vector<32x64xf32>
    %153 = arith.mulf %33, %152 : vector<32x64xf32>
    %c4_i32_81 = arith.constant 4 : i32
    %154 = tpu.dynamic_rotate %151 by %c4_i32_81 dim 0 : vector<32x64xf32>, i32 -> vector<32x64xf32>
    %155 = arith.mulf %29, %154 : vector<32x64xf32>
    %156 = tpu.concatenate %153, %155, %151 in 1 : vector<32x64xf32>, vector<32x64xf32>, vector<32x64xf32> -> vector<32x192xf32>
    %c1_82 = arith.constant 1 : index
    %c1_83 = arith.constant 1 : index
    %c0_84 = arith.constant 0 : index
    %c0_85 = arith.constant 0 : index
    %157 = vector.load %arg3[%c1_82, %c1_83, %c0_84, %c0_85] : memref<3x2x192x64xf32, #tpu.memory_space<vmem>>, vector<1x1x192x64xf32>
    %158 = vector.shape_cast %157 : vector<1x1x192x64xf32> to vector<192x64xf32>
    %cst_86 = arith.constant dense<0.000000e+00> : vector<32x64xf32>
    %159 = tpu.matmul %156, %158, %cst_86 {dimension_numbers = #tpu.dot_dimension_numbers<[1], [0], [0], [1], [0, 0, 1, 1], [], []>} : vector<32x192xf32>, vector<192x64xf32>, vector<32x64xf32> -> vector<32x64xf32>
    %c1_87 = arith.constant 1 : index
    %c1_88 = arith.constant 1 : index
    %c0_89 = arith.constant 0 : index
    %c0_90 = arith.constant 0 : index
    %160 = vector.load %arg4[%c1_87, %c1_88, %c0_89, %c0_90] : memref<3x2x1x64xf32, #tpu.memory_space<vmem>>, vector<1x1x1x64xf32>
    %161 = vector.shape_cast %160 : vector<1x1x1x64xf32> to vector<1x64xf32>
    %162 = vector.broadcast %161 : vector<1x64xf32> to vector<32x64xf32>
    %163 = arith.addf %159, %162 : vector<32x64xf32>
    %164 = arith.mulf %163, %163 : vector<32x64xf32>
    %165 = tpu.concatenate %163, %164 in 1 : vector<32x64xf32>, vector<32x64xf32> -> vector<32x128xf32>
    %cst_91 = arith.constant dense<0.000000e+00> : vector<32x128xf32>
    %166 = tpu.matmul %165, %34, %cst_91 {dimension_numbers = #tpu.dot_dimension_numbers<[1], [0], [0], [1], [0, 0, 1, 1], [], []>} : vector<32x128xf32>, vector<128x128xf32>, vector<32x128xf32> -> vector<32x128xf32>
    %167 = vector.extract_strided_slice %166 {offsets = [0, 0], sizes = [32, 64], strides = [1, 1]} : vector<32x128xf32> to vector<32x64xf32>
    %168 = vector.extract_strided_slice %166 {offsets = [0, 64], sizes = [32, 64], strides = [1, 1]} : vector<32x128xf32> to vector<32x64xf32>
    %169 = arith.mulf %167, %167 : vector<32x64xf32>
    %170 = arith.subf %168, %169 : vector<32x64xf32>
    %cst_92 = arith.constant 0.000000e+00 : f32
    %171 = vector.broadcast %cst_92 : f32 to vector<32x64xf32>
    %172 = arith.maximumf %170, %171 : vector<32x64xf32>
    %173 = arith.subf %163, %167 : vector<32x64xf32>
    %cst_93 = arith.constant 9.99999993E-9 : f32
    %174 = vector.broadcast %cst_93 : f32 to vector<32x64xf32>
    %175 = arith.addf %172, %174 : vector<32x64xf32>
    %176 = math.rsqrt %175 : vector<32x64xf32>
    %177 = arith.mulf %173, %176 : vector<32x64xf32>
    %c1_94 = arith.constant 1 : index
    %c1_95 = arith.constant 1 : index
    %c0_96 = arith.constant 0 : index
    %c0_97 = arith.constant 0 : index
    %178 = vector.load %arg5[%c1_94, %c1_95, %c0_96, %c0_97] : memref<3x2x1x64xf32, #tpu.memory_space<vmem>>, vector<1x1x1x64xf32>
    %179 = vector.shape_cast %178 : vector<1x1x1x64xf32> to vector<1x64xf32>
    %180 = vector.broadcast %179 : vector<1x64xf32> to vector<32x64xf32>
    %181 = arith.mulf %177, %180 : vector<32x64xf32>
    %c1_98 = arith.constant 1 : index
    %c1_99 = arith.constant 1 : index
    %c0_100 = arith.constant 0 : index
    %c0_101 = arith.constant 0 : index
    %182 = vector.load %arg6[%c1_98, %c1_99, %c0_100, %c0_101] : memref<3x2x1x64xf32, #tpu.memory_space<vmem>>, vector<1x1x1x64xf32>
    %183 = vector.shape_cast %182 : vector<1x1x1x64xf32> to vector<1x64xf32>
    %184 = vector.broadcast %183 : vector<1x64xf32> to vector<32x64xf32>
    %185 = arith.addf %181, %184 : vector<32x64xf32>
    %cst_102 = arith.constant 0.000000e+00 : f32
    %186 = vector.broadcast %cst_102 : f32 to vector<32x64xf32>
    %187 = arith.maximumf %185, %186 : vector<32x64xf32>
    %c1_103 = arith.constant 1 : index
    %188 = memref.load %arg7[%c1_103] : memref<3xf32, #tpu.memory_space<smem>>
    %189 = vector.broadcast %188 : f32 to vector<32x64xf32>
    %190 = arith.mulf %189, %187 : vector<32x64xf32>
    %191 = arith.addf %190, %115 : vector<32x64xf32>
    %c8_i32_104 = arith.constant 8 : i32
    %192 = tpu.dynamic_rotate %191 by %c8_i32_104 dim 0 : vector<32x64xf32>, i32 -> vector<32x64xf32>
    %193 = arith.mulf %33, %192 : vector<32x64xf32>
    %c4_i32_105 = arith.constant 4 : i32
    %194 = tpu.dynamic_rotate %191 by %c4_i32_105 dim 0 : vector<32x64xf32>, i32 -> vector<32x64xf32>
    %195 = arith.mulf %29, %194 : vector<32x64xf32>
    %196 = tpu.concatenate %193, %195, %191 in 1 : vector<32x64xf32>, vector<32x64xf32>, vector<32x64xf32> -> vector<32x192xf32>
    %c2 = arith.constant 2 : index
    %c0_106 = arith.constant 0 : index
    %c0_107 = arith.constant 0 : index
    %c0_108 = arith.constant 0 : index
    %197 = vector.load %arg3[%c2, %c0_106, %c0_107, %c0_108] : memref<3x2x192x64xf32, #tpu.memory_space<vmem>>, vector<1x1x192x64xf32>
    %198 = vector.shape_cast %197 : vector<1x1x192x64xf32> to vector<192x64xf32>
    %cst_109 = arith.constant dense<0.000000e+00> : vector<32x64xf32>
    %199 = tpu.matmul %196, %198, %cst_109 {dimension_numbers = #tpu.dot_dimension_numbers<[1], [0], [0], [1], [0, 0, 1, 1], [], []>} : vector<32x192xf32>, vector<192x64xf32>, vector<32x64xf32> -> vector<32x64xf32>
    %c2_110 = arith.constant 2 : index
    %c0_111 = arith.constant 0 : index
    %c0_112 = arith.constant 0 : index
    %c0_113 = arith.constant 0 : index
    %200 = vector.load %arg4[%c2_110, %c0_111, %c0_112, %c0_113] : memref<3x2x1x64xf32, #tpu.memory_space<vmem>>, vector<1x1x1x64xf32>
    %201 = vector.shape_cast %200 : vector<1x1x1x64xf32> to vector<1x64xf32>
    %202 = vector.broadcast %201 : vector<1x64xf32> to vector<32x64xf32>
    %203 = arith.addf %199, %202 : vector<32x64xf32>
    %204 = arith.mulf %203, %203 : vector<32x64xf32>
    %205 = tpu.concatenate %203, %204 in 1 : vector<32x64xf32>, vector<32x64xf32> -> vector<32x128xf32>
    %cst_114 = arith.constant dense<0.000000e+00> : vector<32x128xf32>
    %206 = tpu.matmul %205, %34, %cst_114 {dimension_numbers = #tpu.dot_dimension_numbers<[1], [0], [0], [1], [0, 0, 1, 1], [], []>} : vector<32x128xf32>, vector<128x128xf32>, vector<32x128xf32> -> vector<32x128xf32>
    %207 = vector.extract_strided_slice %206 {offsets = [0, 0], sizes = [32, 64], strides = [1, 1]} : vector<32x128xf32> to vector<32x64xf32>
    %208 = vector.extract_strided_slice %206 {offsets = [0, 64], sizes = [32, 64], strides = [1, 1]} : vector<32x128xf32> to vector<32x64xf32>
    %209 = arith.mulf %207, %207 : vector<32x64xf32>
    %210 = arith.subf %208, %209 : vector<32x64xf32>
    %cst_115 = arith.constant 0.000000e+00 : f32
    %211 = vector.broadcast %cst_115 : f32 to vector<32x64xf32>
    %212 = arith.maximumf %210, %211 : vector<32x64xf32>
    %213 = arith.subf %203, %207 : vector<32x64xf32>
    %cst_116 = arith.constant 9.99999993E-9 : f32
    %214 = vector.broadcast %cst_116 : f32 to vector<32x64xf32>
    %215 = arith.addf %212, %214 : vector<32x64xf32>
    %216 = math.rsqrt %215 : vector<32x64xf32>
    %217 = arith.mulf %213, %216 : vector<32x64xf32>
    %c2_117 = arith.constant 2 : index
    %c0_118 = arith.constant 0 : index
    %c0_119 = arith.constant 0 : index
    %c0_120 = arith.constant 0 : index
    %218 = vector.load %arg5[%c2_117, %c0_118, %c0_119, %c0_120] : memref<3x2x1x64xf32, #tpu.memory_space<vmem>>, vector<1x1x1x64xf32>
    %219 = vector.shape_cast %218 : vector<1x1x1x64xf32> to vector<1x64xf32>
    %220 = vector.broadcast %219 : vector<1x64xf32> to vector<32x64xf32>
    %221 = arith.mulf %217, %220 : vector<32x64xf32>
    %c2_121 = arith.constant 2 : index
    %c0_122 = arith.constant 0 : index
    %c0_123 = arith.constant 0 : index
    %c0_124 = arith.constant 0 : index
    %222 = vector.load %arg6[%c2_121, %c0_122, %c0_123, %c0_124] : memref<3x2x1x64xf32, #tpu.memory_space<vmem>>, vector<1x1x1x64xf32>
    %223 = vector.shape_cast %222 : vector<1x1x1x64xf32> to vector<1x64xf32>
    %224 = vector.broadcast %223 : vector<1x64xf32> to vector<32x64xf32>
    %225 = arith.addf %221, %224 : vector<32x64xf32>
    %cst_125 = arith.constant 0.000000e+00 : f32
    %226 = vector.broadcast %cst_125 : f32 to vector<32x64xf32>
    %227 = arith.maximumf %225, %226 : vector<32x64xf32>
    %c8_i32_126 = arith.constant 8 : i32
    %228 = tpu.dynamic_rotate %227 by %c8_i32_126 dim 0 : vector<32x64xf32>, i32 -> vector<32x64xf32>
    %229 = arith.mulf %33, %228 : vector<32x64xf32>
    %230 = tpu.concatenate %227, %229, %227 in 1 : vector<32x64xf32>, vector<32x64xf32>, vector<32x64xf32> -> vector<32x192xf32>
    %c2_127 = arith.constant 2 : index
    %c1_128 = arith.constant 1 : index
    %c0_129 = arith.constant 0 : index
    %c0_130 = arith.constant 0 : index
    %231 = vector.load %arg3[%c2_127, %c1_128, %c0_129, %c0_130] : memref<3x2x192x64xf32, #tpu.memory_space<vmem>>, vector<1x1x192x64xf32>
    %232 = vector.shape_cast %231 : vector<1x1x192x64xf32> to vector<192x64xf32>
    %cst_131 = arith.constant dense<0.000000e+00> : vector<32x64xf32>
    %233 = tpu.matmul %230, %232, %cst_131 {dimension_numbers = #tpu.dot_dimension_numbers<[1], [0], [0], [1], [0, 0, 1, 1], [], []>} : vector<32x192xf32>, vector<192x64xf32>, vector<32x64xf32> -> vector<32x64xf32>
    %c2_132 = arith.constant 2 : index
    %c1_133 = arith.constant 1 : index
    %c0_134 = arith.constant 0 : index
    %c0_135 = arith.constant 0 : index
    %234 = vector.load %arg4[%c2_132, %c1_133, %c0_134, %c0_135] : memref<3x2x1x64xf32, #tpu.memory_space<vmem>>, vector<1x1x1x64xf32>
    %235 = vector.shape_cast %234 : vector<1x1x1x64xf32> to vector<1x64xf32>
    %236 = vector.broadcast %235 : vector<1x64xf32> to vector<32x64xf32>
    %237 = arith.addf %233, %236 : vector<32x64xf32>
    %238 = arith.mulf %237, %237 : vector<32x64xf32>
    %239 = tpu.concatenate %237, %238 in 1 : vector<32x64xf32>, vector<32x64xf32> -> vector<32x128xf32>
    %cst_136 = arith.constant dense<0.000000e+00> : vector<32x128xf32>
    %240 = tpu.matmul %239, %34, %cst_136 {dimension_numbers = #tpu.dot_dimension_numbers<[1], [0], [0], [1], [0, 0, 1, 1], [], []>} : vector<32x128xf32>, vector<128x128xf32>, vector<32x128xf32> -> vector<32x128xf32>
    %241 = vector.extract_strided_slice %240 {offsets = [0, 0], sizes = [32, 64], strides = [1, 1]} : vector<32x128xf32> to vector<32x64xf32>
    %242 = vector.extract_strided_slice %240 {offsets = [0, 64], sizes = [32, 64], strides = [1, 1]} : vector<32x128xf32> to vector<32x64xf32>
    %243 = arith.mulf %241, %241 : vector<32x64xf32>
    %244 = arith.subf %242, %243 : vector<32x64xf32>
    %cst_137 = arith.constant 0.000000e+00 : f32
    %245 = vector.broadcast %cst_137 : f32 to vector<32x64xf32>
    %246 = arith.maximumf %244, %245 : vector<32x64xf32>
    %247 = arith.subf %237, %241 : vector<32x64xf32>
    %cst_138 = arith.constant 9.99999993E-9 : f32
    %248 = vector.broadcast %cst_138 : f32 to vector<32x64xf32>
    %249 = arith.addf %246, %248 : vector<32x64xf32>
    %250 = math.rsqrt %249 : vector<32x64xf32>
    %251 = arith.mulf %247, %250 : vector<32x64xf32>
    %c2_139 = arith.constant 2 : index
    %c1_140 = arith.constant 1 : index
    %c0_141 = arith.constant 0 : index
    %c0_142 = arith.constant 0 : index
    %252 = vector.load %arg5[%c2_139, %c1_140, %c0_141, %c0_142] : memref<3x2x1x64xf32, #tpu.memory_space<vmem>>, vector<1x1x1x64xf32>
    %253 = vector.shape_cast %252 : vector<1x1x1x64xf32> to vector<1x64xf32>
    %254 = vector.broadcast %253 : vector<1x64xf32> to vector<32x64xf32>
    %255 = arith.mulf %251, %254 : vector<32x64xf32>
    %c2_143 = arith.constant 2 : index
    %c1_144 = arith.constant 1 : index
    %c0_145 = arith.constant 0 : index
    %c0_146 = arith.constant 0 : index
    %256 = vector.load %arg6[%c2_143, %c1_144, %c0_145, %c0_146] : memref<3x2x1x64xf32, #tpu.memory_space<vmem>>, vector<1x1x1x64xf32>
    %257 = vector.shape_cast %256 : vector<1x1x1x64xf32> to vector<1x64xf32>
    %258 = vector.broadcast %257 : vector<1x64xf32> to vector<32x64xf32>
    %259 = arith.addf %255, %258 : vector<32x64xf32>
    %cst_147 = arith.constant 0.000000e+00 : f32
    %260 = vector.broadcast %cst_147 : f32 to vector<32x64xf32>
    %261 = arith.maximumf %259, %260 : vector<32x64xf32>
    %c2_148 = arith.constant 2 : index
    %262 = memref.load %arg7[%c2_148] : memref<3xf32, #tpu.memory_space<smem>>
    %263 = vector.broadcast %262 : f32 to vector<32x64xf32>
    %264 = arith.mulf %263, %261 : vector<32x64xf32>
    %265 = arith.addf %264, %191 : vector<32x64xf32>
    %c0_149 = arith.constant 0 : index
    %c0_150 = arith.constant 0 : index
    %266 = vector.load %arg8[%c0_149, %c0_150] : memref<64x128xf32, #tpu.memory_space<vmem>>, vector<64x128xf32>
    %cst_151 = arith.constant dense<0.000000e+00> : vector<32x128xf32>
    %267 = tpu.matmul %265, %266, %cst_151 {dimension_numbers = #tpu.dot_dimension_numbers<[1], [0], [0], [1], [0, 0, 1, 1], [], []>} : vector<32x64xf32>, vector<64x128xf32>, vector<32x128xf32> -> vector<32x128xf32>
    %c0_152 = arith.constant 0 : index
    %c0_153 = arith.constant 0 : index
    %268 = vector.load %arg9[%c0_152, %c0_153] : memref<1x128xf32, #tpu.memory_space<vmem>>, vector<1x128xf32>
    %269 = vector.broadcast %268 : vector<1x128xf32> to vector<32x128xf32>
    %270 = arith.addf %267, %269 : vector<32x128xf32>
    %c0_154 = arith.constant 0 : index
    %c0_155 = arith.constant 0 : index
    %271 = vector.load %arg11[%c0_154, %c0_155] : memref<32x128xf32, #tpu.memory_space<vmem>>, vector<32x128xf32>
    tpu.vector_store %arg11[%c0_154, %c0_155], %270 {strides = array<i32>} : memref<32x128xf32, #tpu.memory_space<vmem>>, vector<32x128xf32>,
    return
  }
}

</mosaic_0001>

<llo_original>
// kernel: tpu_custom_call.1
$region0: #{tpu_custom_call.1}
  #allocation0 [shape = 'u32[]', space=smem, size = 0x4, offset = 0x4, fixed_abs, tag = 'smem constant byte address 0x4 - core index']
  #allocation1 [shape = 'u32[144,128]{1,0:T(1,128)}', space=vmem, size = 0x12000, scoped, tag = 'internal scratch']
  %s0 = inlined_call_operand.vmem [shape: f32[32,32], index: 0, kind: input, shape index: {}]
  %s1 = inlined_call_operand.vmem [shape: f32[32,64], index: 1, kind: input, shape index: {}]
  %s2 = inlined_call_operand.vmem [shape: f32[1,64], index: 2, kind: input, shape index: {}]
  %s3 = inlined_call_operand.vmem [shape: f32[3,2,192,64], index: 3, kind: input, shape index: {}]
  %s4 = inlined_call_operand.vmem [shape: f32[3,2,1,64], index: 4, kind: input, shape index: {}]
  %s5 = inlined_call_operand.vmem [shape: f32[3,2,1,64], index: 5, kind: input, shape index: {}]
  %s6 = inlined_call_operand.vmem [shape: f32[3,2,1,64], index: 6, kind: input, shape index: {}]
  %s7 = inlined_call_operand.vmem [shape: f32[3], index: 7, kind: input, shape index: {}]
  %s8 = inlined_call_operand.vmem [shape: f32[64,128], index: 8, kind: input, shape index: {}]
  %s9 = inlined_call_operand.vmem [shape: f32[1,128], index: 9, kind: input, shape index: {}]
  %s10 = inlined_call_operand.vmem [shape: f32[128,128], index: 10, kind: input, shape index: {}]
  %s11 = inlined_call_operand.hbm [shape: f32[32,128], index: 11, kind: output, shape index: {}]
  %s12 = sld [smem:[#allocation0]]
  $region58: #{tpu_custom_call.1} parent=0
    _
  %s14 = ssub.s32 1, %s12
  %s15 = scalar_select 0, %s14, %s12
  $region1: #{tpu_custom_call.1} parent=0
    #allocation2 [shape = 'u8[512]{0}', space=smem, size = 0x200, scoped, tag = 'input window, operand 7, single buffered']
    #allocation3 [shape = 's32[1]{0}', space=sflag, size = 0x4, scoped, tag = 'scoped memory for tpu_custom_call.1']
    #allocation4 [shape = 's32[1]{0}', space=sflag, size = 0x4, scoped, tag = 'scoped memory for tpu_custom_call.1']
    #allocation5 [shape = 'u8[16384]{0}', space=vmem, size = 0x4000, scoped, tag = 'output window, operand 0, single buffered']
    %16 = vsyncpa [#allocation4], 0
    %17 = vsyncpa [#allocation3], 0
    // Predicated region
    $region2: #{tpu_custom_call.1} parent=1 // pred_check
      _
    $region3: #{tpu_custom_call.1} parent=1 // pred_check_branch
      %19 = sbr.rel (0) target = $region5
    $region4: #{tpu_custom_call.1} parent=1 // pred_region
      _
    $region5: #{tpu_custom_call.1} parent=1 // pred_fallthru
      _
    // Predicated region
    $region6: #{tpu_custom_call.1} parent=1 // pred_check
      _
    $region7: #{tpu_custom_call.1} parent=1 // pred_check_branch
      %21 = sbr.rel (0) target = $region9
    $region8: #{tpu_custom_call.1} parent=1 // pred_region
      _
    $region9: #{tpu_custom_call.1} parent=1 // pred_fallthru
      _
    // Predicated region
    $region10: #{tpu_custom_call.1} parent=1 // pred_check
      _
    $region11: #{tpu_custom_call.1} parent=1 // pred_check_branch
      %23 = sbr.rel (0) target = $region13
    $region12: #{tpu_custom_call.1} parent=1 // pred_region
      _
    $region13: #{tpu_custom_call.1} parent=1 // pred_fallthru
      _
    // Predicated region
    $region14: #{tpu_custom_call.1} parent=1 // pred_check
      _
    $region15: #{tpu_custom_call.1} parent=1 // pred_check_branch
      %25 = sbr.rel (0) target = $region17
    $region16: #{tpu_custom_call.1} parent=1 // pred_region
      _
    $region17: #{tpu_custom_call.1} parent=1 // pred_fallthru
      _
    // Predicated region
    $region18: #{tpu_custom_call.1} parent=1 // pred_check
      _
    $region19: #{tpu_custom_call.1} parent=1 // pred_check_branch
      %27 = sbr.rel (0) target = $region21
    $region20: #{tpu_custom_call.1} parent=1 // pred_region
      _
    $region21: #{tpu_custom_call.1} parent=1 // pred_fallthru
      _
    // Predicated region
    $region22: #{tpu_custom_call.1} parent=1 // pred_check
      _
    $region23: #{tpu_custom_call.1} parent=1 // pred_check_branch
      %29 = sbr.rel (0) target = $region25
    $region24: #{tpu_custom_call.1} parent=1 // pred_region
      _
    $region25: #{tpu_custom_call.1} parent=1 // pred_fallthru
      _
    // Predicated region
    $region26: #{tpu_custom_call.1} parent=1 // pred_check
      _
    $region27: #{tpu_custom_call.1} parent=1 // pred_check_branch
      %31 = sbr.rel (0) target = $region29
    $region28: #{tpu_custom_call.1} parent=1 // pred_region
      _
    $region29: #{tpu_custom_call.1} parent=1 // pred_fallthru
      _
    // Predicated region
    $region30: #{tpu_custom_call.1} parent=1 // pred_check
      _
    $region31: #{tpu_custom_call.1} parent=1 // pred_check_branch
      %33 = sbr.rel (0) target = $region33
    $region32: #{tpu_custom_call.1} parent=1 // pred_region
      %s35 = ssub.s32 16, 16
      %36 = vsyncadd [#allocation4], %s35
      %s38 = sshll.u32 %s7, 4
      %s39 = int_to_ptr.vmem [resolvable:$true] %s38
      %41 = dma.vmem_to_smem %s39, 16, [#allocation2], [#allocation4]
    $region33: #{tpu_custom_call.1} parent=1 // pred_fallthru
      _
    // Predicated region
    $region34: #{tpu_custom_call.1} parent=1 // pred_check
      _
    $region35: #{tpu_custom_call.1} parent=1 // pred_check_branch
      %43 = sbr.rel (0) target = $region37
    $region36: #{tpu_custom_call.1} parent=1 // pred_region
      _
    $region37: #{tpu_custom_call.1} parent=1 // pred_fallthru
      _
    // Predicated region
    $region38: #{tpu_custom_call.1} parent=1 // pred_check
      _
    $region39: #{tpu_custom_call.1} parent=1 // pred_check_branch
      %45 = sbr.rel (0) target = $region41
    $region40: #{tpu_custom_call.1} parent=1 // pred_region
      _
    $region41: #{tpu_custom_call.1} parent=1 // pred_fallthru
      _
    // Predicated region
    $region42: #{tpu_custom_call.1} parent=1 // pred_check
      _
    $region43: #{tpu_custom_call.1} parent=1 // pred_check_branch
      %47 = sbr.rel (0) target = $region45
    $region44: #{tpu_custom_call.1} parent=1 // pred_region
      _
    $region45: #{tpu_custom_call.1} parent=1 // pred_fallthru
      _
    // Predicated region
    $region46: #{tpu_custom_call.1} parent=1 // pred_check
      _
    $region47: #{tpu_custom_call.1} parent=1 // pred_check_branch
      %49 = sbr.rel (0) target = $region49
    $region48: #{tpu_custom_call.1} parent=1 // pred_region
      %50 = dma.done [#allocation4], 16
    $region49: #{tpu_custom_call.1} parent=1 // pred_fallthru
      _
    %51 = sfence
    %v52 = vld [vmem:[%s0] sm:$0xff]
    %v53 = vld [vmem:[%s0 + $0x8] sm:$0xff]
    %v54 = vld [vmem:[%s0 + $0x10] sm:$0xff]
    %v55 = vld [vmem:[%s0 + $0x18] sm:$0xff]
    %v56 = vlaneseq
    %v57 = vshrl.u32 %v56, 7
    %v58 = vadd.s32 %v57, 8
    %v59 = vadd.s32 %v57, 16
    %v60 = vadd.s32 %v57, 24
    %vm61 = vcmp.lt.s32.totalorder %v57, 0
    %v62 = vsub.s32 0, %v57
    %v63 = vsel %vm61, %v62, %v57
    %v64 = vshrl.u32 %v63, 4
    %v65 = vand.u32 %v63, 15
    %v66 = vsub.s32 0, %v65
    %v67 = vsel %vm61, %v66, %v65
    %vm68 = vcmp.lt.s32.totalorder %v58, 0
    %v69 = vsub.s32 0, %v58
    %v70 = vsel %vm68, %v69, %v58
    %v71 = vshrl.u32 %v70, 4
    %v72 = vand.u32 %v70, 15
    %v73 = vsub.s32 0, %v72
    %v74 = vsel %vm68, %v73, %v72
    %vm75 = vcmp.lt.s32.totalorder %v59, 0
    %v76 = vsub.s32 0, %v59
    %v77 = vsel %vm75, %v76, %v59
    %v78 = vshrl.u32 %v77, 4
    %v79 = vand.u32 %v77, 15
    %v80 = vsub.s32 0, %v79
    %v81 = vsel %vm75, %v80, %v79
    %vm82 = vcmp.lt.s32.totalorder %v60, 0
    %v83 = vsub.s32 0, %v60
    %v84 = vsel %vm82, %v83, %v60
    %v85 = vshrl.u32 %v84, 4
    %v86 = vand.u32 %v84, 15
    %v87 = vsub.s32 0, %v86
    %v88 = vsel %vm82, %v87, %v86
    %vm89 = vcmp.ne.s32.totalorder %v67, 0
    %vm90 = vcmp.ne.s32.totalorder %v74, 0
    %vm91 = vcmp.ne.s32.totalorder %v81, 0
    %vm92 = vcmp.ne.s32.totalorder %v88, 0
    %vm93 = vcmp.lt.s32.totalorder %v67, 0
    %vm94 = vcmp.lt.s32.totalorder %v74, 0
    %vm95 = vcmp.lt.s32.totalorder %v81, 0
    %vm96 = vcmp.lt.s32.totalorder %v88, 0
    %vm97 = vmand %vm93, %vm89
    %vm98 = vmand %vm94, %vm90
    %vm99 = vmand %vm95, %vm91
    %vm100 = vmand %vm96, %vm92
    %v101 = vadd.s32 %v67, 16
    %v102 = vadd.s32 %v74, 16
    %v103 = vadd.s32 %v81, 16
    %v104 = vadd.s32 %v88, 16
    %v105 = vsel %vm97, %v101, %v67
    %v106 = vsel %vm98, %v102, %v74
    %v107 = vsel %vm99, %v103, %v81
    %v108 = vsel %vm100, %v104, %v88
    %vm109 = vcmp.ge.s32.totalorder %v105, 1
    %vm110 = vcmp.ge.s32.totalorder %v106, 1
    %vm111 = vcmp.ge.s32.totalorder %v107, 1
    %vm112 = vcmp.ge.s32.totalorder %v108, 1
    %v113 = vsel %vm109, 1, 0
    %v114 = vsel %vm110, 1, 0
    %v115 = vsel %vm111, 1, 0
    %v116 = vsel %vm112, 1, 0
    %v117 = vcvt.s32.f32 %v113
    %v118 = vcvt.s32.f32 %v114
    %v119 = vcvt.s32.f32 %v115
    %v120 = vcvt.s32.f32 %v116
    %vm121 = vcmp.ge.s32.totalorder %v105, 2
    %vm122 = vcmp.ge.s32.totalorder %v106, 2
    %vm123 = vcmp.ge.s32.totalorder %v107, 2
    %vm124 = vcmp.ge.s32.totalorder %v108, 2
    %v125 = vsel %vm121, 1, 0
    %v126 = vsel %vm122, 1, 0
    %v127 = vsel %vm123, 1, 0
    %v128 = vsel %vm124, 1, 0
    %v129 = vcvt.s32.f32 %v125
    %v130 = vcvt.s32.f32 %v126
    %v131 = vcvt.s32.f32 %v127
    %v132 = vcvt.s32.f32 %v128
    %vm133 = vcmp.ge.s32.totalorder %v105, 4
    %vm134 = vcmp.ge.s32.totalorder %v106, 4
    %vm135 = vcmp.ge.s32.totalorder %v107, 4
    %vm136 = vcmp.ge.s32.totalorder %v108, 4
    %v137 = vsel %vm133, 1, 0
    %v138 = vsel %vm134, 1, 0
    %v139 = vsel %vm135, 1, 0
    %v140 = vsel %vm136, 1, 0
    %v141 = vcvt.s32.f32 %v137
    %v142 = vcvt.s32.f32 %v138
    %v143 = vcvt.s32.f32 %v139
    %v144 = vcvt.s32.f32 %v140
    %vm145 = vcmp.ge.s32.totalorder %v105, 8
    %vm146 = vcmp.ge.s32.totalorder %v106, 8
    %vm147 = vcmp.ge.s32.totalorder %v107, 8
    %vm148 = vcmp.ge.s32.totalorder %v108, 8
    %v149 = vsel %vm145, 1, 0
    %v150 = vsel %vm146, 1, 0
    %v151 = vsel %vm147, 1, 0
    %v152 = vsel %vm148, 1, 0
    %v153 = vcvt.s32.f32 %v149
    %v154 = vcvt.s32.f32 %v150
    %v155 = vcvt.s32.f32 %v151
    %v156 = vcvt.s32.f32 %v152
    %v157 = vld [vmem:[%s10] sm:$0xff]
    %v158 = vld [vmem:[%s10 + $0x8] sm:$0xff]
    %v159 = vld [vmem:[%s10 + $0x10] sm:$0xff]
    %v160 = vld [vmem:[%s10 + $0x18] sm:$0xff]
    %v161 = vld [vmem:[%s10 + $0x20] sm:$0xff]
    %v162 = vld [vmem:[%s10 + $0x28] sm:$0xff]
    %v163 = vld [vmem:[%s10 + $0x30] sm:$0xff]
    %v164 = vld [vmem:[%s10 + $0x38] sm:$0xff]
    %v165 = vld [vmem:[%s10 + $0x40] sm:$0xff]
    %v166 = vld [vmem:[%s10 + $0x48] sm:$0xff]
    %v167 = vld [vmem:[%s10 + $0x50] sm:$0xff]
    %v168 = vld [vmem:[%s10 + $0x58] sm:$0xff]
    %v169 = vld [vmem:[%s10 + $0x60] sm:$0xff]
    %v170 = vld [vmem:[%s10 + $0x68] sm:$0xff]
    %v171 = vld [vmem:[%s10 + $0x70] sm:$0xff]
    %v172 = vld [vmem:[%s10 + $0x78] sm:$0xff]
    %v173 = vld [vmem:[%s1] sm:$0xff]
    %v174 = vld [vmem:[%s1 + $0x8] sm:$0xff]
    %v175 = vld [vmem:[%s1 + $0x10] sm:$0xff]
    %v176 = vld [vmem:[%s1 + $0x18] sm:$0xff]
    %v177 = vld [vmem:[%s2] sm:$0x1]
    %v179 = vlaneseq
    %v180 = vshrl.u32 %v179, 7
    %v181 = vsub.s32 0, %v180
    %v182 = vrot.slane %v177, %v181
    %vm184 = vcmask 261120
    %v186 = vsel %vm184, %v52, 0
    %v189 = vsel %vm184, %v53, 0
    %v192 = vsel %vm184, %v54, 0
    %v195 = vsel %vm184, %v55, 0
    %197 = vmatprep.subr.mxu0 0.0
    %198 = vmatpush1.msra.mxu0 0.0
    %199 = vmatprep.subr.mxu0 0.0
    %200 = vmatpush1.msra.mxu0 0.0
    %201 = vmatprep.subr.mxu0 0.0
    %202 = vmatpush1.msra.mxu0 0.0
    %203 = vmatprep.subr.mxu0 0.0
    %204 = vmatpush1.msra.mxu0 0.0
    %205 = vmatprep.subr.mxu0 0.0
    %206 = vmatpush1.msra.mxu0 0.0
    %207 = vmatprep.subr.mxu0 0.0
    %208 = vmatpush1.msra.mxu0 0.0
    %209 = vmatprep.subr.mxu0 0.0
    %210 = vmatpush1.msra.mxu0 0.0
    %211 = vmatprep.subr.mxu0 0.0
    %212 = vmatpush1.msra.mxu0 0.0
    %213 = vmatprep.subr.mxu0 0.0
    %214 = vmatpush1.msra.mxu0 0.0
    %215 = vmatprep.subr.mxu0 0.0
    %216 = vmatpush1.msra.mxu0 0.0
    %217 = vmatprep.subr.mxu0 0.0
    %218 = vmatpush1.msra.mxu0 0.0
    %219 = vmatprep.subr.mxu0 0.0
    %220 = vmatpush1.msra.mxu0 0.0
    %221 = vmatprep.subr.mxu0 0.0
    %222 = vmatpush1.msra.mxu0 %v176
    %223 = vmatprep.subr.mxu0 0.0
    %224 = vmatpush1.msra.mxu0 %v175
    %225 = vmatprep.subr.mxu0 0.0
    %226 = vmatpush1.msra.mxu0 %v174
    %227 = vmatprep.subr.mxu0 0.0
    %228 = vmatpush1.msra.mxu0 %v173
    %229 = vmatprep.subr.mxu0 0.0
    %230 = vmatpush2.msra.mxu0 0.0
    %231 = vmatprep.subr.mxu0 0.0
    %232 = vmatpush2.msra.mxu0 0.0
    %233 = vmatprep.subr.mxu0 0.0
    %234 = vmatpush2.msra.mxu0 0.0
    %235 = vmatprep.subr.mxu0 0.0
    %236 = vmatpush2.msra.mxu0 0.0
    %237 = vmatprep.subr.mxu0 0.0
    %238 = vmatpush2.msra.mxu0 0.0
    %239 = vmatprep.subr.mxu0 0.0
    %240 = vmatpush2.msra.mxu0 0.0
    %241 = vmatprep.subr.mxu0 0.0
    %242 = vmatpush2.msra.mxu0 0.0
    %243 = vmatprep.subr.mxu0 0.0
    %244 = vmatpush2.msra.mxu0 0.0
    %245 = vmatprep.subr.mxu0 0.0
    %246 = vmatpush2.msra.mxu0 0.0
    %247 = vmatprep.subr.mxu0 0.0
    %248 = vmatpush2.msra.mxu0 0.0
    %249 = vmatprep.subr.mxu0 0.0
    %250 = vmatpush2.msra.mxu0 0.0
    %251 = vmatprep.subr.mxu0 0.0
    %252 = vmatpush2.msra.mxu0 0.0
    %253 = vmatprep.subr.mxu0 0.0
    %254 = vmatpush2.msra.mxu0 0.0
    %255 = vmatprep.subr.mxu0 0.0
    %256 = vmatpush2.msra.mxu0 0.0
    %257 = vmatprep.subr.mxu0 0.0
    %258 = vmatpush2.msra.mxu0 0.0
    %259 = vmatprep.subr.mxu0 0.0
    %260 = vmatpush2.msra.mxu0 0.0
    %261 = vmatprep.mubr.f32.mxu0 0.0
    %262 = vmatmul.mubr.f32.gmra.mxu0 %v186
    %v263 = vpop.f32.mrf.mxu0
    %v264 = vadd.f32 %v182, %v263
    %v265 = vpop.f32.mrf.mxu0
    %266 = vmatprep.mubr.f32.mxu0 0.0
    %267 = vmatmul.mubr.f32.gmra.mxu0 %v189
    %v268 = vpop.f32.mrf.mxu0
    %v269 = vadd.f32 %v182, %v268
    %v270 = vpop.f32.mrf.mxu0
    %271 = vmatprep.mubr.f32.mxu0 0.0
    %272 = vmatmul.mubr.f32.gmra.mxu0 %v192
    %v273 = vpop.f32.mrf.mxu0
    %v274 = vadd.f32 %v182, %v273
    %v275 = vpop.f32.mrf.mxu0
    %276 = vmatprep.mubr.f32.mxu0 0.0
    %277 = vmatmul.mubr.f32.gmra.mxu0 %v195
    %v278 = vpop.f32.mrf.mxu0
    %v279 = vadd.f32 %v182, %v278
    %v280 = vpop.f32.mrf.mxu0
    %281 = vdwg.mxu0
    %v282 = vrot.slane %v264, 6
    %v283 = vrot.slane %v269, 6
    %v284 = vrot.slane %v274, 6
    %v285 = vrot.slane %v279, 6
    %vm286 = vcmp.lt.s32.totalorder %v57, 2
    %v287 = vsel %vm286, %v284, %v285
    %v288 = vsel %vm286, %v283, %v284
    %v289 = vsel %vm286, %v282, %v283
    %v290 = vsel %vm286, %v285, %v282
    %v291 = vmul.f32 %v129, %v290
    %v292 = vmul.f32 %v130, %v289
    %v293 = vmul.f32 %v131, %v288
    %v294 = vmul.f32 %v132, %v287
    %v295 = vrot.slane %v264, 7
    %v296 = vrot.slane %v269, 7
    %v297 = vrot.slane %v274, 7
    %v298 = vrot.slane %v279, 7
    %vm299 = vcmp.lt.s32.totalorder %v57, 1
    %v300 = vsel %vm299, %v297, %v298
    %v301 = vsel %vm299, %v296, %v297
    %v302 = vsel %vm299, %v295, %v296
    %v303 = vsel %vm299, %v298, %v295
    %v304 = vmul.f32 %v117, %v303
    %v305 = vmul.f32 %v118, %v302
    %v306 = vmul.f32 %v119, %v301
    %v307 = vmul.f32 %v120, %v300
    %312 = vrot.lane.b32.xlu0 %v304, 64
    %v313 = vpop.permute.xlu0 %312
    %314 = vrot.lane.b32.xlu0 %v305, 64
    %v315 = vpop.permute.xlu0 %314
    %316 = vrot.lane.b32.xlu0 %v306, 64
    %v317 = vpop.permute.xlu0 %316
    %318 = vrot.lane.b32.xlu0 %v307, 64
    %v319 = vpop.permute.xlu0 %318
    %vm324 = vcmask 523264
    %v325 = vsel %vm324, %v291, %v313
    %v326 = vsel %vm324, %v292, %v315
    %v327 = vsel %vm324, %v293, %v317
    %v328 = vsel %vm324, %v294, %v319
    %v329 = vld [vmem:[%s3] sm:$0xff]
    %v330 = vld [vmem:[%s3 + $0x8] sm:$0xff]
    %v331 = vld [vmem:[%s3 + $0x10] sm:$0xff]
    %v332 = vld [vmem:[%s3 + $0x18] sm:$0xff]
    %v333 = vld [vmem:[%s3 + $0x20] sm:$0xff]
    %v334 = vld [vmem:[%s3 + $0x28] sm:$0xff]
    %v335 = vld [vmem:[%s3 + $0x30] sm:$0xff]
    %v336 = vld [vmem:[%s3 + $0x38] sm:$0xff]
    %v337 = vld [vmem:[%s3 + $0x40] sm:$0xff]
    %v338 = vld [vmem:[%s3 + $0x48] sm:$0xff]
    %v339 = vld [vmem:[%s3 + $0x50] sm:$0xff]
    %v340 = vld [vmem:[%s3 + $0x58] sm:$0xff]
    %v341 = vld [vmem:[%s3 + $0x60] sm:$0xff]
    %v342 = vld [vmem:[%s3 + $0x68] sm:$0xff]
    %v343 = vld [vmem:[%s3 + $0x70] sm:$0xff]
    %v344 = vld [vmem:[%s3 + $0x78] sm:$0xff]
    %v345 = vld [vmem:[%s3 + $0x80] sm:$0xff]
    %v346 = vld [vmem:[%s3 + $0x88] sm:$0xff]
    %v347 = vld [vmem:[%s3 + $0x90] sm:$0xff]
    %v348 = vld [vmem:[%s3 + $0x98] sm:$0xff]
    %v349 = vld [vmem:[%s3 + $0xa0] sm:$0xff]
    %v350 = vld [vmem:[%s3 + $0xa8] sm:$0xff]
    %v351 = vld [vmem:[%s3 + $0xb0] sm:$0xff]
    %v352 = vld [vmem:[%s3 + $0xb8] sm:$0xff]
    %v353 = vld [vmem:[%s4] sm:$0x1]
    %v355 = vlaneseq
    %v356 = vshrl.u32 %v355, 7
    %v357 = vsub.s32 0, %v356
    %v358 = vrot.slane %v353, %v357
    %v361 = vsel %vm324, %v264, 0
    %v364 = vsel %vm324, %v269, 0
    %v367 = vsel %vm324, %v274, 0
    %v370 = vsel %vm324, %v279, 0
    %372 = vmatprep.subr.mxu0 0.0
    %373 = vmatpush1.msra.mxu0 %v344
    %374 = vmatprep.subr.mxu0 0.0
    %375 = vmatpush1.msra.mxu0 %v343
    %376 = vmatprep.subr.mxu0 0.0
    %377 = vmatpush1.msra.mxu0 %v342
    %378 = vmatprep.subr.mxu0 0.0
    %379 = vmatpush1.msra.mxu0 %v341
    %380 = vmatprep.subr.mxu0 0.0
    %381 = vmatpush1.msra.mxu0 %v340
    %382 = vmatprep.subr.mxu0 0.0
    %383 = vmatpush1.msra.mxu0 %v339
    %384 = vmatprep.subr.mxu0 0.0
    %385 = vmatpush1.msra.mxu0 %v338
    %386 = vmatprep.subr.mxu0 0.0
    %387 = vmatpush1.msra.mxu0 %v337
    %388 = vmatprep.subr.mxu0 0.0
    %389 = vmatpush1.msra.mxu0 %v336
    %390 = vmatprep.subr.mxu0 0.0
    %391 = vmatpush1.msra.mxu0 %v335
    %392 = vmatprep.subr.mxu0 0.0
    %393 = vmatpush1.msra.mxu0 %v334
    %394 = vmatprep.subr.mxu0 0.0
    %395 = vmatpush1.msra.mxu0 %v333
    %396 = vmatprep.subr.mxu0 0.0
    %397 = vmatpush1.msra.mxu0 %v332
    %398 = vmatprep.subr.mxu0 0.0
    %399 = vmatpush1.msra.mxu0 %v331
    %400 = vmatprep.subr.mxu0 0.0
    %401 = vmatpush1.msra.mxu0 %v330
    %402 = vmatprep.subr.mxu0 0.0
    %403 = vmatpush1.msra.mxu0 %v329
    %404 = vmatprep.subr.mxu0 0.0
    %405 = vmatpush2.msra.mxu0 0.0
    %406 = vmatprep.subr.mxu0 0.0
    %407 = vmatpush2.msra.mxu0 0.0
    %408 = vmatprep.subr.mxu0 0.0
    %409 = vmatpush2.msra.mxu0 0.0
    %410 = vmatprep.subr.mxu0 0.0
    %411 = vmatpush2.msra.mxu0 0.0
    %412 = vmatprep.subr.mxu0 0.0
    %413 = vmatpush2.msra.mxu0 0.0
    %414 = vmatprep.subr.mxu0 0.0
    %415 = vmatpush2.msra.mxu0 0.0
    %416 = vmatprep.subr.mxu0 0.0
    %417 = vmatpush2.msra.mxu0 0.0
    %418 = vmatprep.subr.mxu0 0.0
    %419 = vmatpush2.msra.mxu0 0.0
    %420 = vmatprep.subr.mxu0 0.0
    %421 = vmatpush2.msra.mxu0 %v352
    %422 = vmatprep.subr.mxu0 0.0
    %423 = vmatpush2.msra.mxu0 %v351
    %424 = vmatprep.subr.mxu0 0.0
    %425 = vmatpush2.msra.mxu0 %v350
    %426 = vmatprep.subr.mxu0 0.0
    %427 = vmatpush2.msra.mxu0 %v349
    %428 = vmatprep.subr.mxu0 0.0
    %429 = vmatpush2.msra.mxu0 %v348
    %430 = vmatprep.subr.mxu0 0.0
    %431 = vmatpush2.msra.mxu0 %v347
    %432 = vmatprep.subr.mxu0 0.0
    %433 = vmatpush2.msra.mxu0 %v346
    %434 = vmatprep.subr.mxu0 0.0
    %435 = vmatpush2.msra.mxu0 %v345
    %436 = vmatprep.mubr.f32.mxu0 %v361
    %437 = vmatmul.mubr.f32.gmra.mxu0 %v325
    %v438 = vpop.f32.mrf.mxu0
    %v439 = vadd.f32 %v358, %v438
    %v440 = vpop.f32.mrf.mxu0
    %441 = vmatprep.mubr.f32.mxu0 %v364
    %442 = vmatmul.mubr.f32.gmra.mxu0 %v326
    %v443 = vpop.f32.mrf.mxu0
    %v444 = vadd.f32 %v358, %v443
    %v445 = vpop.f32.mrf.mxu0
    %446 = vmatprep.mubr.f32.mxu0 %v367
    %447 = vmatmul.mubr.f32.gmra.mxu0 %v327
    %v448 = vpop.f32.mrf.mxu0
    %v449 = vadd.f32 %v358, %v448
    %v450 = vpop.f32.mrf.mxu0
    %451 = vmatprep.mubr.f32.mxu0 %v370
    %452 = vmatmul.mubr.f32.gmra.mxu0 %v328
    %v453 = vpop.f32.mrf.mxu0
    %v454 = vadd.f32 %v358, %v453
    %v455 = vpop.f32.mrf.mxu0
    %456 = vdwg.mxu0
    %v457 = vmul.f32 %v439, %v439
    %v458 = vmul.f32 %v444, %v444
    %v459 = vmul.f32 %v449, %v449
    %v460 = vmul.f32 %v454, %v454
    %465 = vrot.lane.b32.xlu0 %v457, 64
    %v466 = vpop.permute.xlu0 %465
    %467 = vrot.lane.b32.xlu0 %v458, 64
    %v468 = vpop.permute.xlu0 %467
    %469 = vrot.lane.b32.xlu0 %v459, 64
    %v470 = vpop.permute.xlu0 %469
    %471 = vrot.lane.b32.xlu0 %v460, 64
    %v472 = vpop.permute.xlu0 %471
    %v477 = vsel %vm324, %v439, %v466
    %v478 = vsel %vm324, %v444, %v468
    %v479 = vsel %vm324, %v449, %v470
    %v480 = vsel %vm324, %v454, %v472
    %481 = vmatprep.subr.mxu0 0.0
    %482 = vmatpush1.msra.mxu0 %v172
    %483 = vmatprep.subr.mxu0 0.0
    %484 = vmatpush1.msra.mxu0 %v171
    %485 = vmatprep.subr.mxu0 0.0
    %486 = vmatpush1.msra.mxu0 %v170
    %487 = vmatprep.subr.mxu0 0.0
    %488 = vmatpush1.msra.mxu0 %v169
    %489 = vmatprep.subr.mxu0 0.0
    %490 = vmatpush1.msra.mxu0 %v168
    %491 = vmatprep.subr.mxu0 0.0
    %492 = vmatpush1.msra.mxu0 %v167
    %493 = vmatprep.subr.mxu0 0.0
    %494 = vmatpush1.msra.mxu0 %v166
    %495 = vmatprep.subr.mxu0 0.0
    %496 = vmatpush1.msra.mxu0 %v165
    %497 = vmatprep.subr.mxu0 0.0
    %498 = vmatpush1.msra.mxu0 %v164
    %499 = vmatprep.subr.mxu0 0.0
    %500 = vmatpush1.msra.mxu0 %v163
    %501 = vmatprep.subr.mxu0 0.0
    %502 = vmatpush1.msra.mxu0 %v162
    %503 = vmatprep.subr.mxu0 0.0
    %504 = vmatpush1.msra.mxu0 %v161
    %505 = vmatprep.subr.mxu0 0.0
    %506 = vmatpush1.msra.mxu0 %v160
    %507 = vmatprep.subr.mxu0 0.0
    %508 = vmatpush1.msra.mxu0 %v159
    %509 = vmatprep.subr.mxu0 0.0
    %510 = vmatpush1.msra.mxu0 %v158
    %511 = vmatprep.subr.mxu0 0.0
    %512 = vmatpush1.msra.mxu0 %v157
    %513 = vmatprep.subr.mxu0 0.0
    %514 = vmatpush2.msra.mxu0 0.0
    %515 = vmatprep.subr.mxu0 0.0
    %516 = vmatpush2.msra.mxu0 0.0
    %517 = vmatprep.subr.mxu0 0.0
    %518 = vmatpush2.msra.mxu0 0.0
    %519 = vmatprep.subr.mxu0 0.0
    %520 = vmatpush2.msra.mxu0 0.0
    %521 = vmatprep.subr.mxu0 0.0
    %522 = vmatpush2.msra.mxu0 0.0
    %523 = vmatprep.subr.mxu0 0.0
    %524 = vmatpush2.msra.mxu0 0.0
    %525 = vmatprep.subr.mxu0 0.0
    %526 = vmatpush2.msra.mxu0 0.0
    %527 = vmatprep.subr.mxu0 0.0
    %528 = vmatpush2.msra.mxu0 0.0
    %529 = vmatprep.subr.mxu0 0.0
    %530 = vmatpush2.msra.mxu0 0.0
    %531 = vmatprep.subr.mxu0 0.0
    %532 = vmatpush2.msra.mxu0 0.0
    %533 = vmatprep.subr.mxu0 0.0
    %534 = vmatpush2.msra.mxu0 0.0
    %535 = vmatprep.subr.mxu0 0.0
    %536 = vmatpush2.msra.mxu0 0.0
    %537 = vmatprep.subr.mxu0 0.0
    %538 = vmatpush2.msra.mxu0 0.0
    %539 = vmatprep.subr.mxu0 0.0
    %540 = vmatpush2.msra.mxu0 0.0
    %541 = vmatprep.subr.mxu0 0.0
    %542 = vmatpush2.msra.mxu0 0.0
    %543 = vmatprep.subr.mxu0 0.0
    %544 = vmatpush2.msra.mxu0 0.0
    %545 = vmatprep.mubr.f32.mxu0 0.0
    %546 = vmatmul.mubr.f32.gmra.mxu0 %v477
    %v547 = vpop.f32.mrf.mxu0
    %v548 = vadd.f32 0.0, %v547
    %v549 = vpop.f32.mrf.mxu0
    %550 = vmatprep.mubr.f32.mxu0 0.0
    %551 = vmatmul.mubr.f32.gmra.mxu0 %v478
    %v552 = vpop.f32.mrf.mxu0
    %v553 = vadd.f32 0.0, %v552
    %v554 = vpop.f32.mrf.mxu0
    %555 = vmatprep.mubr.f32.mxu0 0.0
    %556 = vmatmul.mubr.f32.gmra.mxu0 %v479
    %v557 = vpop.f32.mrf.mxu0
    %v558 = vadd.f32 0.0, %v557
    %v559 = vpop.f32.mrf.mxu0
    %560 = vmatprep.mubr.f32.mxu0 0.0
    %561 = vmatmul.mubr.f32.gmra.mxu0 %v480
    %v562 = vpop.f32.mrf.mxu0
    %v563 = vadd.f32 0.0, %v562
    %v564 = vpop.f32.mrf.mxu0
    %565 = vdwg.mxu0
    %v566 = vmul.f32 %v548, %v548
    %v567 = vmul.f32 %v553, %v553
    %v568 = vmul.f32 %v558, %v558
    %v569 = vmul.f32 %v563, %v563
    %574 = vrot.lane.b32.xlu0 %v566, 64
    %v575 = vpop.permute.xlu0 %574
    %576 = vrot.lane.b32.xlu0 %v567, 64
    %v577 = vpop.permute.xlu0 %576
    %578 = vrot.lane.b32.xlu0 %v568, 64
    %v579 = vpop.permute.xlu0 %578
    %580 = vrot.lane.b32.xlu0 %v569, 64
    %v581 = vpop.permute.xlu0 %580
    %v586 = vsub.f32 %v548, %v575
    %v587 = vsub.f32 %v553, %v577
    %v588 = vsub.f32 %v558, %v579
    %v589 = vsub.f32 %v563, %v581
    %v590 = vmax.f32 %v586, 0.0
    %v591 = vmax.f32 %v587, 0.0
    %v592 = vmax.f32 %v588, 0.0
    %v593 = vmax.f32 %v589, 0.0
    %v594 = vsub.f32 %v439, %v548
    %v595 = vsub.f32 %v444, %v553
    %v596 = vsub.f32 %v449, %v558
    %v597 = vsub.f32 %v454, %v563
    %v598 = vadd.f32 %v590, 1e-08
    %v599 = vadd.f32 %v591, 1e-08
    %v600 = vadd.f32 %v592, 1e-08
    %v601 = vadd.f32 %v593, 1e-08
    %v602 = vrsqrt.pop %v598
    %v603 = vrsqrt.pop %v599
    %v604 = vrsqrt.pop %v600
    %v605 = vrsqrt.pop %v601
    %610 = vrot.lane.b32.xlu0 %v602, 64
    %v611 = vpop.permute.xlu0 %610
    %612 = vrot.lane.b32.xlu0 %v603, 64
    %v613 = vpop.permute.xlu0 %612
    %614 = vrot.lane.b32.xlu0 %v604, 64
    %v615 = vpop.permute.xlu0 %614
    %616 = vrot.lane.b32.xlu0 %v605, 64
    %v617 = vpop.permute.xlu0 %616
    %v622 = vmul.f32 %v594, %v611
    %v623 = vmul.f32 %v595, %v613
    %v624 = vmul.f32 %v596, %v615
    %v625 = vmul.f32 %v597, %v617
    %v626 = vld [vmem:[%s5] sm:$0x1]
    %v628 = vlaneseq
    %v629 = vshrl.u32 %v628, 7
    %v630 = vsub.s32 0, %v629
    %v631 = vrot.slane %v626, %v630
    %v633 = vmul.f32 %v622, %v631
    %v634 = vmul.f32 %v623, %v631
    %v635 = vmul.f32 %v624, %v631
    %v636 = vmul.f32 %v625, %v631
    %v637 = vld [vmem:[%s6] sm:$0x1]
    %v639 = vlaneseq
    %v640 = vshrl.u32 %v639, 7
    %v641 = vsub.s32 0, %v640
    %v642 = vrot.slane %v637, %v641
    %v644 = vadd.f32 %v633, %v642
    %v645 = vadd.f32 %v634, %v642
    %v646 = vadd.f32 %v635, %v642
    %v647 = vadd.f32 %v636, %v642
    %v648 = vmax.f32 %v644, 0.0
    %v649 = vmax.f32 %v645, 0.0
    %v650 = vmax.f32 %v646, 0.0
    %v651 = vmax.f32 %v647, 0.0
    %v652 = vrot.slane %v648, 4
    %v653 = vrot.slane %v649, 4
    %v654 = vrot.slane %v650, 4
    %v655 = vrot.slane %v651, 4
    %vm656 = vcmp.lt.s32.totalorder %v57, 4
    %v657 = vsel %vm656, %v654, %v655
    %v658 = vsel %vm656, %v653, %v654
    %v659 = vsel %vm656, %v652, %v653
    %v660 = vsel %vm656, %v655, %v652
    %v661 = vmul.f32 %v141, %v660
    %v662 = vmul.f32 %v142, %v659
    %v663 = vmul.f32 %v143, %v658
    %v664 = vmul.f32 %v144, %v657
    %v665 = vrot.slane %v648, 6
    %v666 = vrot.slane %v649, 6
    %v667 = vrot.slane %v650, 6
    %v668 = vrot.slane %v651, 6
    %v669 = vsel %vm286, %v667, %v668
    %v670 = vsel %vm286, %v666, %v667
    %v671 = vsel %vm286, %v665, %v666
    %v672 = vsel %vm286, %v668, %v665
    %v673 = vmul.f32 %v129, %v672
    %v674 = vmul.f32 %v130, %v671
    %v675 = vmul.f32 %v131, %v670
    %v676 = vmul.f32 %v132, %v669
    %681 = vrot.lane.b32.xlu0 %v673, 64
    %v682 = vpop.permute.xlu0 %681
    %683 = vrot.lane.b32.xlu0 %v674, 64
    %v684 = vpop.permute.xlu0 %683
    %685 = vrot.lane.b32.xlu0 %v675, 64
    %v686 = vpop.permute.xlu0 %685
    %687 = vrot.lane.b32.xlu0 %v676, 64
    %v688 = vpop.permute.xlu0 %687
    %v693 = vsel %vm324, %v661, %v682
    %v694 = vsel %vm324, %v662, %v684
    %v695 = vsel %vm324, %v663, %v686
    %v696 = vsel %vm324, %v664, %v688
    %s697 = scalar_lea.vmem %s3, 192
    %v698 = vld [vmem:[%s697] sm:$0xff]
    %v699 = vld [vmem:[%s697 + $0x8] sm:$0xff]
    %v700 = vld [vmem:[%s697 + $0x10] sm:$0xff]
    %v701 = vld [vmem:[%s697 + $0x18] sm:$0xff]
    %v702 = vld [vmem:[%s697 + $0x20] sm:$0xff]
    %v703 = vld [vmem:[%s697 + $0x28] sm:$0xff]
    %v704 = vld [vmem:[%s697 + $0x30] sm:$0xff]
    %v705 = vld [vmem:[%s697 + $0x38] sm:$0xff]
    %v706 = vld [vmem:[%s697 + $0x40] sm:$0xff]
    %v707 = vld [vmem:[%s697 + $0x48] sm:$0xff]
    %v708 = vld [vmem:[%s697 + $0x50] sm:$0xff]
    %v709 = vld [vmem:[%s697 + $0x58] sm:$0xff]
    %v710 = vld [vmem:[%s697 + $0x60] sm:$0xff]
    %v711 = vld [vmem:[%s697 + $0x68] sm:$0xff]
    %v712 = vld [vmem:[%s697 + $0x70] sm:$0xff]
    %v713 = vld [vmem:[%s697 + $0x78] sm:$0xff]
    %v714 = vld [vmem:[%s697 + $0x80] sm:$0xff]
    %v715 = vld [vmem:[%s697 + $0x88] sm:$0xff]
    %v716 = vld [vmem:[%s697 + $0x90] sm:$0xff]
    %v717 = vld [vmem:[%s697 + $0x98] sm:$0xff]
    %v718 = vld [vmem:[%s697 + $0xa0] sm:$0xff]
    %v719 = vld [vmem:[%s697 + $0xa8] sm:$0xff]
    %v720 = vld [vmem:[%s697 + $0xb0] sm:$0xff]
    %v721 = vld [vmem:[%s697 + $0xb8] sm:$0xff]
    %s722 = scalar_lea.vmem %s4, 1
    %v723 = vld [vmem:[%s722] sm:$0x1]
    %v725 = vlaneseq
    %v726 = vshrl.u32 %v725, 7
    %v727 = vsub.s32 0, %v726
    %v728 = vrot.slane %v723, %v727
    %v731 = vsel %vm324, %v648, 0
    %v734 = vsel %vm324, %v649, 0
    %v737 = vsel %vm324, %v650, 0
    %v740 = vsel %vm324, %v651, 0
    %742 = vmatprep.subr.mxu0 0.0
    %743 = vmatpush1.msra.mxu0 %v713
    %744 = vmatprep.subr.mxu0 0.0
    %745 = vmatpush1.msra.mxu0 %v712
    %746 = vmatprep.subr.mxu0 0.0
    %747 = vmatpush1.msra.mxu0 %v711
    %748 = vmatprep.subr.mxu0 0.0
    %749 = vmatpush1.msra.mxu0 %v710
    %750 = vmatprep.subr.mxu0 0.0
    %751 = vmatpush1.msra.mxu0 %v709
    %752 = vmatprep.subr.mxu0 0.0
    %753 = vmatpush1.msra.mxu0 %v708
    %754 = vmatprep.subr.mxu0 0.0
    %755 = vmatpush1.msra.mxu0 %v707
    %756 = vmatprep.subr.mxu0 0.0
    %757 = vmatpush1.msra.mxu0 %v706
    %758 = vmatprep.subr.mxu0 0.0
    %759 = vmatpush1.msra.mxu0 %v705
    %760 = vmatprep.subr.mxu0 0.0
    %761 = vmatpush1.msra.mxu0 %v704
    %762 = vmatprep.subr.mxu0 0.0
    %763 = vmatpush1.msra.mxu0 %v703
    %764 = vmatprep.subr.mxu0 0.0
    %765 = vmatpush1.msra.mxu0 %v702
    %766 = vmatprep.subr.mxu0 0.0
    %767 = vmatpush1.msra.mxu0 %v701
    %768 = vmatprep.subr.mxu0 0.0
    %769 = vmatpush1.msra.mxu0 %v700
    %770 = vmatprep.subr.mxu0 0.0
    %771 = vmatpush1.msra.mxu0 %v699
    %772 = vmatprep.subr.mxu0 0.0
    %773 = vmatpush1.msra.mxu0 %v698
    %774 = vmatprep.subr.mxu0 0.0
    %775 = vmatpush2.msra.mxu0 0.0
    %776 = vmatprep.subr.mxu0 0.0
    %777 = vmatpush2.msra.mxu0 0.0
    %778 = vmatprep.subr.mxu0 0.0
    %779 = vmatpush2.msra.mxu0 0.0
    %780 = vmatprep.subr.mxu0 0.0
    %781 = vmatpush2.msra.mxu0 0.0
    %782 = vmatprep.subr.mxu0 0.0
    %783 = vmatpush2.msra.mxu0 0.0
    %784 = vmatprep.subr.mxu0 0.0
    %785 = vmatpush2.msra.mxu0 0.0
    %786 = vmatprep.subr.mxu0 0.0
    %787 = vmatpush2.msra.mxu0 0.0
    %788 = vmatprep.subr.mxu0 0.0
    %789 = vmatpush2.msra.mxu0 0.0
    %790 = vmatprep.subr.mxu0 0.0
    %791 = vmatpush2.msra.mxu0 %v721
    %792 = vmatprep.subr.mxu0 0.0
    %793 = vmatpush2.msra.mxu0 %v720
    %794 = vmatprep.subr.mxu0 0.0
    %795 = vmatpush2.msra.mxu0 %v719
    %796 = vmatprep.subr.mxu0 0.0
    %797 = vmatpush2.msra.mxu0 %v718
    %798 = vmatprep.subr.mxu0 0.0
    %799 = vmatpush2.msra.mxu0 %v717
    %800 = vmatprep.subr.mxu0 0.0
    %801 = vmatpush2.msra.mxu0 %v716
    %802 = vmatprep.subr.mxu0 0.0
    %803 = vmatpush2.msra.mxu0 %v715
    %804 = vmatprep.subr.mxu0 0.0
    %805 = vmatpush2.msra.mxu0 %v714
    %806 = vmatprep.mubr.f32.mxu0 %v731
    %807 = vmatmul.mubr.f32.gmra.mxu0 %v693
    %v808 = vpop.f32.mrf.mxu0
    %v809 = vadd.f32 %v728, %v808
    %v810 = vpop.f32.mrf.mxu0
    %811 = vmatprep.mubr.f32.mxu0 %v734
    %812 = vmatmul.mubr.f32.gmra.mxu0 %v694
    %v813 = vpop.f32.mrf.mxu0
    %v814 = vadd.f32 %v728, %v813
    %v815 = vpop.f32.mrf.mxu0
    %816 = vmatprep.mubr.f32.mxu0 %v737
    %817 = vmatmul.mubr.f32.gmra.mxu0 %v695
    %v818 = vpop.f32.mrf.mxu0
    %v819 = vadd.f32 %v728, %v818
    %v820 = vpop.f32.mrf.mxu0
    %821 = vmatprep.mubr.f32.mxu0 %v740
    %822 = vmatmul.mubr.f32.gmra.mxu0 %v696
    %v823 = vpop.f32.mrf.mxu0
    %v824 = vadd.f32 %v728, %v823
    %v825 = vpop.f32.mrf.mxu0
    %826 = vdwg.mxu0
    %v827 = vmul.f32 %v809, %v809
    %v828 = vmul.f32 %v814, %v814
    %v829 = vmul.f32 %v819, %v819
    %v830 = vmul.f32 %v824, %v824
    %835 = vrot.lane.b32.xlu0 %v827, 64
    %v836 = vpop.permute.xlu0 %835
    %837 = vrot.lane.b32.xlu0 %v828, 64
    %v838 = vpop.permute.xlu0 %837
    %839 = vrot.lane.b32.xlu0 %v829, 64
    %v840 = vpop.permute.xlu0 %839
    %841 = vrot.lane.b32.xlu0 %v830, 64
    %v842 = vpop.permute.xlu0 %841
    %v847 = vsel %vm324, %v809, %v836
    %v848 = vsel %vm324, %v814, %v838
    %v849 = vsel %vm324, %v819, %v840
    %v850 = vsel %vm324, %v824, %v842
    %851 = vmatprep.subr.mxu0 0.0
    %852 = vmatpush1.msra.mxu0 %v172
    %853 = vmatprep.subr.mxu0 0.0
    %854 = vmatpush1.msra.mxu0 %v171
    %855 = vmatprep.subr.mxu0 0.0
    %856 = vmatpush1.msra.mxu0 %v170
    %857 = vmatprep.subr.mxu0 0.0
    %858 = vmatpush1.msra.mxu0 %v169
    %859 = vmatprep.subr.mxu0 0.0
    %860 = vmatpush1.msra.mxu0 %v168
    %861 = vmatprep.subr.mxu0 0.0
    %862 = vmatpush1.msra.mxu0 %v167
    %863 = vmatprep.subr.mxu0 0.0
    %864 = vmatpush1.msra.mxu0 %v166
    %865 = vmatprep.subr.mxu0 0.0
    %866 = vmatpush1.msra.mxu0 %v165
    %867 = vmatprep.subr.mxu0 0.0
    %868 = vmatpush1.msra.mxu0 %v164
    %869 = vmatprep.subr.mxu0 0.0
    %870 = vmatpush1.msra.mxu0 %v163
    %871 = vmatprep.subr.mxu0 0.0
    %872 = vmatpush1.msra.mxu0 %v162
    %873 = vmatprep.subr.mxu0 0.0
    %874 = vmatpush1.msra.mxu0 %v161
    %875 = vmatprep.subr.mxu0 0.0
    %876 = vmatpush1.msra.mxu0 %v160
    %877 = vmatprep.subr.mxu0 0.0
    %878 = vmatpush1.msra.mxu0 %v159
    %879 = vmatprep.subr.mxu0 0.0
    %880 = vmatpush1.msra.mxu0 %v158
    %881 = vmatprep.subr.mxu0 0.0
    %882 = vmatpush1.msra.mxu0 %v157
    %883 = vmatprep.subr.mxu0 0.0
    %884 = vmatpush2.msra.mxu0 0.0
    %885 = vmatprep.subr.mxu0 0.0
    %886 = vmatpush2.msra.mxu0 0.0
    %887 = vmatprep.subr.mxu0 0.0
    %888 = vmatpush2.msra.mxu0 0.0
    %889 = vmatprep.subr.mxu0 0.0
    %890 = vmatpush2.msra.mxu0 0.0
    %891 = vmatprep.subr.mxu0 0.0
    %892 = vmatpush2.msra.mxu0 0.0
    %893 = vmatprep.subr.mxu0 0.0
    %894 = vmatpush2.msra.mxu0 0.0
    %895 = vmatprep.subr.mxu0 0.0
    %896 = vmatpush2.msra.mxu0 0.0
    %897 = vmatprep.subr.mxu0 0.0
    %898 = vmatpush2.msra.mxu0 0.0
    %899 = vmatprep.subr.mxu0 0.0
    %900 = vmatpush2.msra.mxu0 0.0
    %901 = vmatprep.subr.mxu0 0.0
    %902 = vmatpush2.msra.mxu0 0.0
    %903 = vmatprep.subr.mxu0 0.0
    %904 = vmatpush2.msra.mxu0 0.0
    %905 = vmatprep.subr.mxu0 0.0
    %906 = vmatpush2.msra.mxu0 0.0
    %907 = vmatprep.subr.mxu0 0.0
    %908 = vmatpush2.msra.mxu0 0.0
    %909 = vmatprep.subr.mxu0 0.0
    %910 = vmatpush2.msra.mxu0 0.0
    %911 = vmatprep.subr.mxu0 0.0
    %912 = vmatpush2.msra.mxu0 0.0
    %913 = vmatprep.subr.mxu0 0.0
    %914 = vmatpush2.msra.mxu0 0.0
    %915 = vmatprep.mubr.f32.mxu0 0.0
    %916 = vmatmul.mubr.f32.gmra.mxu0 %v847
    %v917 = vpop.f32.mrf.mxu0
    %v918 = vadd.f32 0.0, %v917
    %v919 = vpop.f32.mrf.mxu0
    %920 = vmatprep.mubr.f32.mxu0 0.0
    %921 = vmatmul.mubr.f32.gmra.mxu0 %v848
    %v922 = vpop.f32.mrf.mxu0
    %v923 = vadd.f32 0.0, %v922
    %v924 = vpop.f32.mrf.mxu0
    %925 = vmatprep.mubr.f32.mxu0 0.0
    %926 = vmatmul.mubr.f32.gmra.mxu0 %v849
    %v927 = vpop.f32.mrf.mxu0
    %v928 = vadd.f32 0.0, %v927
    %v929 = vpop.f32.mrf.mxu0
    %930 = vmatprep.mubr.f32.mxu0 0.0
    %931 = vmatmul.mubr.f32.gmra.mxu0 %v850
    %v932 = vpop.f32.mrf.mxu0
    %v933 = vadd.f32 0.0, %v932
    %v934 = vpop.f32.mrf.mxu0
    %935 = vdwg.mxu0
    %v936 = vmul.f32 %v918, %v918
    %v937 = vmul.f32 %v923, %v923
    %v938 = vmul.f32 %v928, %v928
    %v939 = vmul.f32 %v933, %v933
    %944 = vrot.lane.b32.xlu0 %v936, 64
    %v945 = vpop.permute.xlu0 %944
    %946 = vrot.lane.b32.xlu0 %v937, 64
    %v947 = vpop.permute.xlu0 %946
    %948 = vrot.lane.b32.xlu0 %v938, 64
    %v949 = vpop.permute.xlu0 %948
    %950 = vrot.lane.b32.xlu0 %v939, 64
    %v951 = vpop.permute.xlu0 %950
    %v956 = vsub.f32 %v918, %v945
    %v957 = vsub.f32 %v923, %v947
    %v958 = vsub.f32 %v928, %v949
    %v959 = vsub.f32 %v933, %v951
    %v960 = vmax.f32 %v956, 0.0
    %v961 = vmax.f32 %v957, 0.0
    %v962 = vmax.f32 %v958, 0.0
    %v963 = vmax.f32 %v959, 0.0
    %v964 = vsub.f32 %v809, %v918
    %v965 = vsub.f32 %v814, %v923
    %v966 = vsub.f32 %v819, %v928
    %v967 = vsub.f32 %v824, %v933
    %v968 = vadd.f32 %v960, 1e-08
    %v969 = vadd.f32 %v961, 1e-08
    %v970 = vadd.f32 %v962, 1e-08
    %v971 = vadd.f32 %v963, 1e-08
    %v972 = vrsqrt.pop %v968
    %v973 = vrsqrt.pop %v969
    %v974 = vrsqrt.pop %v970
    %v975 = vrsqrt.pop %v971
    %980 = vrot.lane.b32.xlu0 %v972, 64
    %v981 = vpop.permute.xlu0 %980
    %982 = vrot.lane.b32.xlu0 %v973, 64
    %v983 = vpop.permute.xlu0 %982
    %984 = vrot.lane.b32.xlu0 %v974, 64
    %v985 = vpop.permute.xlu0 %984
    %986 = vrot.lane.b32.xlu0 %v975, 64
    %v987 = vpop.permute.xlu0 %986
    %v992 = vmul.f32 %v964, %v981
    %v993 = vmul.f32 %v965, %v983
    %v994 = vmul.f32 %v966, %v985
    %v995 = vmul.f32 %v967, %v987
    %s996 = scalar_lea.vmem %s5, 1
    %v997 = vld [vmem:[%s996] sm:$0x1]
    %v999 = vlaneseq
    %v1000 = vshrl.u32 %v999, 7
    %v1001 = vsub.s32 0, %v1000
    %v1002 = vrot.slane %v997, %v1001
    %v1004 = vmul.f32 %v992, %v1002
    %v1005 = vmul.f32 %v993, %v1002
    %v1006 = vmul.f32 %v994, %v1002
    %v1007 = vmul.f32 %v995, %v1002
    %s1008 = scalar_lea.vmem %s6, 1
    %v1009 = vld [vmem:[%s1008] sm:$0x1]
    %v1011 = vlaneseq
    %v1012 = vshrl.u32 %v1011, 7
    %v1013 = vsub.s32 0, %v1012
    %v1014 = vrot.slane %v1009, %v1013
    %v1016 = vadd.f32 %v1004, %v1014
    %v1017 = vadd.f32 %v1005, %v1014
    %v1018 = vadd.f32 %v1006, %v1014
    %v1019 = vadd.f32 %v1007, %v1014
    %v1020 = vmax.f32 %v1016, 0.0
    %v1021 = vmax.f32 %v1017, 0.0
    %v1022 = vmax.f32 %v1018, 0.0
    %v1023 = vmax.f32 %v1019, 0.0
    %s1024 = sld [smem:[#allocation2]]
    %v1025 = vstv %s1024
    %v1026 = vmul.f32 %v1025, %v1020
    %v1027 = vmul.f32 %v1025, %v1021
    %v1028 = vmul.f32 %v1025, %v1022
    %v1029 = vmul.f32 %v1025, %v1023
    %v1030 = vadd.f32 %v1026, %v264
    %v1031 = vadd.f32 %v1027, %v269
    %v1032 = vadd.f32 %v1028, %v274
    %v1033 = vadd.f32 %v1029, %v279
    %v1034 = vrot.slane %v1030, 4
    %v1035 = vrot.slane %v1031, 4
    %v1036 = vrot.slane %v1032, 4
    %v1037 = vrot.slane %v1033, 4
    %v1038 = vsel %vm656, %v1036, %v1037
    %v1039 = vsel %vm656, %v1035, %v1036
    %v1040 = vsel %vm656, %v1034, %v1035
    %v1041 = vsel %vm656, %v1037, %v1034
    %v1042 = vmul.f32 %v141, %v1041
    %v1043 = vmul.f32 %v142, %v1040
    %v1044 = vmul.f32 %v143, %v1039
    %v1045 = vmul.f32 %v144, %v1038
    %v1046 = vrot.slane %v1030, 6
    %v1047 = vrot.slane %v1031, 6
    %v1048 = vrot.slane %v1032, 6
    %v1049 = vrot.slane %v1033, 6
    %v1050 = vsel %vm286, %v1048, %v1049
    %v1051 = vsel %vm286, %v1047, %v1048
    %v1052 = vsel %vm286, %v1046, %v1047
    %v1053 = vsel %vm286, %v1049, %v1046
    %v1054 = vmul.f32 %v129, %v1053
    %v1055 = vmul.f32 %v130, %v1052
    %v1056 = vmul.f32 %v131, %v1051
    %v1057 = vmul.f32 %v132, %v1050
    %1062 = vrot.lane.b32.xlu0 %v1054, 64
    %v1063 = vpop.permute.xlu0 %1062
    %1064 = vrot.lane.b32.xlu0 %v1055, 64
    %v1065 = vpop.permute.xlu0 %1064
    %1066 = vrot.lane.b32.xlu0 %v1056, 64
    %v1067 = vpop.permute.xlu0 %1066
    %1068 = vrot.lane.b32.xlu0 %v1057, 64
    %v1069 = vpop.permute.xlu0 %1068
    %v1074 = vsel %vm324, %v1042, %v1063
    %v1075 = vsel %vm324, %v1043, %v1065
    %v1076 = vsel %vm324, %v1044, %v1067
    %v1077 = vsel %vm324, %v1045, %v1069
    %s1078 = scalar_lea.vmem %s3, 384
    %v1079 = vld [vmem:[%s1078] sm:$0xff]
    %v1080 = vld [vmem:[%s1078 + $0x8] sm:$0xff]
    %v1081 = vld [vmem:[%s1078 + $0x10] sm:$0xff]
    %v1082 = vld [vmem:[%s1078 + $0x18] sm:$0xff]
    %v1083 = vld [vmem:[%s1078 + $0x20] sm:$0xff]
    %v1084 = vld [vmem:[%s1078 + $0x28] sm:$0xff]
    %v1085 = vld [vmem:[%s1078 + $0x30] sm:$0xff]
    %v1086 = vld [vmem:[%s1078 + $0x38] sm:$0xff]
    %v1087 = vld [vmem:[%s1078 + $0x40] sm:$0xff]
    %v1088 = vld [vmem:[%s1078 + $0x48] sm:$0xff]
    %v1089 = vld [vmem:[%s1078 + $0x50] sm:$0xff]
    %v1090 = vld [vmem:[%s1078 + $0x58] sm:$0xff]
    %v1091 = vld [vmem:[%s1078 + $0x60] sm:$0xff]
    %v1092 = vld [vmem:[%s1078 + $0x68] sm:$0xff]
    %v1093 = vld [vmem:[%s1078 + $0x70] sm:$0xff]
    %v1094 = vld [vmem:[%s1078 + $0x78] sm:$0xff]
    %v1095 = vld [vmem:[%s1078 + $0x80] sm:$0xff]
    %v1096 = vld [vmem:[%s1078 + $0x88] sm:$0xff]
    %v1097 = vld [vmem:[%s1078 + $0x90] sm:$0xff]
    %v1098 = vld [vmem:[%s1078 + $0x98] sm:$0xff]
    %v1099 = vld [vmem:[%s1078 + $0xa0] sm:$0xff]
    %v1100 = vld [vmem:[%s1078 + $0xa8] sm:$0xff]
    %v1101 = vld [vmem:[%s1078 + $0xb0] sm:$0xff]
    %v1102 = vld [vmem:[%s1078 + $0xb8] sm:$0xff]
    %s1103 = scalar_lea.vmem %s4, 2
    %v1104 = vld [vmem:[%s1103] sm:$0x1]
    %v1106 = vlaneseq
    %v1107 = vshrl.u32 %v1106, 7
    %v1108 = vsub.s32 0, %v1107
    %v1109 = vrot.slane %v1104, %v1108
    %v1112 = vsel %vm324, %v1030, 0
    %v1115 = vsel %vm324, %v1031, 0
    %v1118 = vsel %vm324, %v1032, 0
    %v1121 = vsel %vm324, %v1033, 0
    %1123 = vmatprep.subr.mxu0 0.0
    %1124 = vmatpush1.msra.mxu0 %v1094
    %1125 = vmatprep.subr.mxu0 0.0
    %1126 = vmatpush1.msra.mxu0 %v1093
    %1127 = vmatprep.subr.mxu0 0.0
    %1128 = vmatpush1.msra.mxu0 %v1092
    %1129 = vmatprep.subr.mxu0 0.0
    %1130 = vmatpush1.msra.mxu0 %v1091
    %1131 = vmatprep.subr.mxu0 0.0
    %1132 = vmatpush1.msra.mxu0 %v1090
    %1133 = vmatprep.subr.mxu0 0.0
    %1134 = vmatpush1.msra.mxu0 %v1089
    %1135 = vmatprep.subr.mxu0 0.0
    %1136 = vmatpush1.msra.mxu0 %v1088
    %1137 = vmatprep.subr.mxu0 0.0
    %1138 = vmatpush1.msra.mxu0 %v1087
    %1139 = vmatprep.subr.mxu0 0.0
    %1140 = vmatpush1.msra.mxu0 %v1086
    %1141 = vmatprep.subr.mxu0 0.0
    %1142 = vmatpush1.msra.mxu0 %v1085
    %1143 = vmatprep.subr.mxu0 0.0
    %1144 = vmatpush1.msra.mxu0 %v1084
    %1145 = vmatprep.subr.mxu0 0.0
    %1146 = vmatpush1.msra.mxu0 %v1083
    %1147 = vmatprep.subr.mxu0 0.0
    %1148 = vmatpush1.msra.mxu0 %v1082
    %1149 = vmatprep.subr.mxu0 0.0
    %1150 = vmatpush1.msra.mxu0 %v1081
    %1151 = vmatprep.subr.mxu0 0.0
    %1152 = vmatpush1.msra.mxu0 %v1080
    %1153 = vmatprep.subr.mxu0 0.0
    %1154 = vmatpush1.msra.mxu0 %v1079
    %1155 = vmatprep.subr.mxu0 0.0
    %1156 = vmatpush2.msra.mxu0 0.0
    %1157 = vmatprep.subr.mxu0 0.0
    %1158 = vmatpush2.msra.mxu0 0.0
    %1159 = vmatprep.subr.mxu0 0.0
    %1160 = vmatpush2.msra.mxu0 0.0
    %1161 = vmatprep.subr.mxu0 0.0
    %1162 = vmatpush2.msra.mxu0 0.0
    %1163 = vmatprep.subr.mxu0 0.0
    %1164 = vmatpush2.msra.mxu0 0.0
    %1165 = vmatprep.subr.mxu0 0.0
    %1166 = vmatpush2.msra.mxu0 0.0
    %1167 = vmatprep.subr.mxu0 0.0
    %1168 = vmatpush2.msra.mxu0 0.0
    %1169 = vmatprep.subr.mxu0 0.0
    %1170 = vmatpush2.msra.mxu0 0.0
    %1171 = vmatprep.subr.mxu0 0.0
    %1172 = vmatpush2.msra.mxu0 %v1102
    %1173 = vmatprep.subr.mxu0 0.0
    %1174 = vmatpush2.msra.mxu0 %v1101
    %1175 = vmatprep.subr.mxu0 0.0
    %1176 = vmatpush2.msra.mxu0 %v1100
    %1177 = vmatprep.subr.mxu0 0.0
    %1178 = vmatpush2.msra.mxu0 %v1099
    %1179 = vmatprep.subr.mxu0 0.0
    %1180 = vmatpush2.msra.mxu0 %v1098
    %1181 = vmatprep.subr.mxu0 0.0
    %1182 = vmatpush2.msra.mxu0 %v1097
    %1183 = vmatprep.subr.mxu0 0.0
    %1184 = vmatpush2.msra.mxu0 %v1096
    %1185 = vmatprep.subr.mxu0 0.0
    %1186 = vmatpush2.msra.mxu0 %v1095
    %1187 = vmatprep.mubr.f32.mxu0 %v1112
    %1188 = vmatmul.mubr.f32.gmra.mxu0 %v1074
    %v1189 = vpop.f32.mrf.mxu0
    %v1190 = vadd.f32 %v1109, %v1189
    %v1191 = vpop.f32.mrf.mxu0
    %1192 = vmatprep.mubr.f32.mxu0 %v1115
    %1193 = vmatmul.mubr.f32.gmra.mxu0 %v1075
    %v1194 = vpop.f32.mrf.mxu0
    %v1195 = vadd.f32 %v1109, %v1194
    %v1196 = vpop.f32.mrf.mxu0
    %1197 = vmatprep.mubr.f32.mxu0 %v1118
    %1198 = vmatmul.mubr.f32.gmra.mxu0 %v1076
    %v1199 = vpop.f32.mrf.mxu0
    %v1200 = vadd.f32 %v1109, %v1199
    %v1201 = vpop.f32.mrf.mxu0
    %1202 = vmatprep.mubr.f32.mxu0 %v1121
    %1203 = vmatmul.mubr.f32.gmra.mxu0 %v1077
    %v1204 = vpop.f32.mrf.mxu0
    %v1205 = vadd.f32 %v1109, %v1204
    %v1206 = vpop.f32.mrf.mxu0
    %1207 = vdwg.mxu0
    %v1208 = vmul.f32 %v1190, %v1190
    %v1209 = vmul.f32 %v1195, %v1195
    %v1210 = vmul.f32 %v1200, %v1200
    %v1211 = vmul.f32 %v1205, %v1205
    %1216 = vrot.lane.b32.xlu0 %v1208, 64
    %v1217 = vpop.permute.xlu0 %1216
    %1218 = vrot.lane.b32.xlu0 %v1209, 64
    %v1219 = vpop.permute.xlu0 %1218
    %1220 = vrot.lane.b32.xlu0 %v1210, 64
    %v1221 = vpop.permute.xlu0 %1220
    %1222 = vrot.lane.b32.xlu0 %v1211, 64
    %v1223 = vpop.permute.xlu0 %1222
    %v1228 = vsel %vm324, %v1190, %v1217
    %v1229 = vsel %vm324, %v1195, %v1219
    %v1230 = vsel %vm324, %v1200, %v1221
    %v1231 = vsel %vm324, %v1205, %v1223
    %1232 = vmatprep.subr.mxu0 0.0
    %1233 = vmatpush1.msra.mxu0 %v172
    %1234 = vmatprep.subr.mxu0 0.0
    %1235 = vmatpush1.msra.mxu0 %v171
    %1236 = vmatprep.subr.mxu0 0.0
    %1237 = vmatpush1.msra.mxu0 %v170
    %1238 = vmatprep.subr.mxu0 0.0
    %1239 = vmatpush1.msra.mxu0 %v169
    %1240 = vmatprep.subr.mxu0 0.0
    %1241 = vmatpush1.msra.mxu0 %v168
    %1242 = vmatprep.subr.mxu0 0.0
    %1243 = vmatpush1.msra.mxu0 %v167
    %1244 = vmatprep.subr.mxu0 0.0
    %1245 = vmatpush1.msra.mxu0 %v166
    %1246 = vmatprep.subr.mxu0 0.0
    %1247 = vmatpush1.msra.mxu0 %v165
    %1248 = vmatprep.subr.mxu0 0.0
    %1249 = vmatpush1.msra.mxu0 %v164
    %1250 = vmatprep.subr.mxu0 0.0
    %1251 = vmatpush1.msra.mxu0 %v163
    %1252 = vmatprep.subr.mxu0 0.0
    %1253 = vmatpush1.msra.mxu0 %v162
    %1254 = vmatprep.subr.mxu0 0.0
    %1255 = vmatpush1.msra.mxu0 %v161
    %1256 = vmatprep.subr.mxu0 0.0
    %1257 = vmatpush1.msra.mxu0 %v160
    %1258 = vmatprep.subr.mxu0 0.0
    %1259 = vmatpush1.msra.mxu0 %v159
    %1260 = vmatprep.subr.mxu0 0.0
    %1261 = vmatpush1.msra.mxu0 %v158
    %1262 = vmatprep.subr.mxu0 0.0
    %1263 = vmatpush1.msra.mxu0 %v157
    %1264 = vmatprep.subr.mxu0 0.0
    %1265 = vmatpush2.msra.mxu0 0.0
    %1266 = vmatprep.subr.mxu0 0.0
    %1267 = vmatpush2.msra.mxu0 0.0
    %1268 = vmatprep.subr.mxu0 0.0
    %1269 = vmatpush2.msra.mxu0 0.0
    %1270 = vmatprep.subr.mxu0 0.0
    %1271 = vmatpush2.msra.mxu0 0.0
    %1272 = vmatprep.subr.mxu0 0.0
    %1273 = vmatpush2.msra.mxu0 0.0
    %1274 = vmatprep.subr.mxu0 0.0
    %1275 = vmatpush2.msra.mxu0 0.0
    %1276 = vmatprep.subr.mxu0 0.0
    %1277 = vmatpush2.msra.mxu0 0.0
    %1278 = vmatprep.subr.mxu0 0.0
    %1279 = vmatpush2.msra.mxu0 0.0
    %1280 = vmatprep.subr.mxu0 0.0
    %1281 = vmatpush2.msra.mxu0 0.0
    %1282 = vmatprep.subr.mxu0 0.0
    %1283 = vmatpush2.msra.mxu0 0.0
    %1284 = vmatprep.subr.mxu0 0.0
    %1285 = vmatpush2.msra.mxu0 0.0
    %1286 = vmatprep.subr.mxu0 0.0
    %1287 = vmatpush2.msra.mxu0 0.0
    %1288 = vmatprep.subr.mxu0 0.0
    %1289 = vmatpush2.msra.mxu0 0.0
    %1290 = vmatprep.subr.mxu0 0.0
    %1291 = vmatpush2.msra.mxu0 0.0
    %1292 = vmatprep.subr.mxu0 0.0
    %1293 = vmatpush2.msra.mxu0 0.0
    %1294 = vmatprep.subr.mxu0 0.0
    %1295 = vmatpush2.msra.mxu0 0.0
    %1296 = vmatprep.mubr.f32.mxu0 0.0
    %1297 = vmatmul.mubr.f32.gmra.mxu0 %v1228
    %v1298 = vpop.f32.mrf.mxu0
    %v1299 = vadd.f32 0.0, %v1298
    %v1300 = vpop.f32.mrf.mxu0
    %1301 = vmatprep.mubr.f32.mxu0 0.0
    %1302 = vmatmul.mubr.f32.gmra.mxu0 %v1229
    %v1303 = vpop.f32.mrf.mxu0
    %v1304 = vadd.f32 0.0, %v1303
    %v1305 = vpop.f32.mrf.mxu0
    %1306 = vmatprep.mubr.f32.mxu0 0.0
    %1307 = vmatmul.mubr.f32.gmra.mxu0 %v1230
    %v1308 = vpop.f32.mrf.mxu0
    %v1309 = vadd.f32 0.0, %v1308
    %v1310 = vpop.f32.mrf.mxu0
    %1311 = vmatprep.mubr.f32.mxu0 0.0
    %1312 = vmatmul.mubr.f32.gmra.mxu0 %v1231
    %v1313 = vpop.f32.mrf.mxu0
    %v1314 = vadd.f32 0.0, %v1313
    %v1315 = vpop.f32.mrf.mxu0
    %1316 = vdwg.mxu0
    %v1317 = vmul.f32 %v1299, %v1299
    %v1318 = vmul.f32 %v1304, %v1304
    %v1319 = vmul.f32 %v1309, %v1309
    %v1320 = vmul.f32 %v1314, %v1314
    %1325 = vrot.lane.b32.xlu0 %v1317, 64
    %v1326 = vpop.permute.xlu0 %1325
    %1327 = vrot.lane.b32.xlu0 %v1318, 64
    %v1328 = vpop.permute.xlu0 %1327
    %1329 = vrot.lane.b32.xlu0 %v1319, 64
    %v1330 = vpop.permute.xlu0 %1329
    %1331 = vrot.lane.b32.xlu0 %v1320, 64
    %v1332 = vpop.permute.xlu0 %1331
    %v1337 = vsub.f32 %v1299, %v1326
    %v1338 = vsub.f32 %v1304, %v1328
    %v1339 = vsub.f32 %v1309, %v1330
    %v1340 = vsub.f32 %v1314, %v1332
    %v1341 = vmax.f32 %v1337, 0.0
    %v1342 = vmax.f32 %v1338, 0.0
    %v1343 = vmax.f32 %v1339, 0.0
    %v1344 = vmax.f32 %v1340, 0.0
    %v1345 = vsub.f32 %v1190, %v1299
    %v1346 = vsub.f32 %v1195, %v1304
    %v1347 = vsub.f32 %v1200, %v1309
    %v1348 = vsub.f32 %v1205, %v1314
    %v1349 = vadd.f32 %v1341, 1e-08
    %v1350 = vadd.f32 %v1342, 1e-08
    %v1351 = vadd.f32 %v1343, 1e-08
    %v1352 = vadd.f32 %v1344, 1e-08
    %v1353 = vrsqrt.pop %v1349
    %v1354 = vrsqrt.pop %v1350
    %v1355 = vrsqrt.pop %v1351
    %v1356 = vrsqrt.pop %v1352
    %1361 = vrot.lane.b32.xlu0 %v1353, 64
    %v1362 = vpop.permute.xlu0 %1361
    %1363 = vrot.lane.b32.xlu0 %v1354, 64
    %v1364 = vpop.permute.xlu0 %1363
    %1365 = vrot.lane.b32.xlu0 %v1355, 64
    %v1366 = vpop.permute.xlu0 %1365
    %1367 = vrot.lane.b32.xlu0 %v1356, 64
    %v1368 = vpop.permute.xlu0 %1367
    %v1373 = vmul.f32 %v1345, %v1362
    %v1374 = vmul.f32 %v1346, %v1364
    %v1375 = vmul.f32 %v1347, %v1366
    %v1376 = vmul.f32 %v1348, %v1368
    %s1377 = scalar_lea.vmem %s5, 2
    %v1378 = vld [vmem:[%s1377] sm:$0x1]
    %v1380 = vlaneseq
    %v1381 = vshrl.u32 %v1380, 7
    %v1382 = vsub.s32 0, %v1381
    %v1383 = vrot.slane %v1378, %v1382
    %v1385 = vmul.f32 %v1373, %v1383
    %v1386 = vmul.f32 %v1374, %v1383
    %v1387 = vmul.f32 %v1375, %v1383
    %v1388 = vmul.f32 %v1376, %v1383
    %s1389 = scalar_lea.vmem %s6, 2
    %v1390 = vld [vmem:[%s1389] sm:$0x1]
    %v1392 = vlaneseq
    %v1393 = vshrl.u32 %v1392, 7
    %v1394 = vsub.s32 0, %v1393
    %v1395 = vrot.slane %v1390, %v1394
    %v1397 = vadd.f32 %v1385, %v1395
    %v1398 = vadd.f32 %v1386, %v1395
    %v1399 = vadd.f32 %v1387, %v1395
    %v1400 = vadd.f32 %v1388, %v1395
    %v1401 = vmax.f32 %v1397, 0.0
    %v1402 = vmax.f32 %v1398, 0.0
    %v1403 = vmax.f32 %v1399, 0.0
    %v1404 = vmax.f32 %v1400, 0.0
    %v1405 = vmul.f32 %v153, %v1404
    %v1406 = vmul.f32 %v154, %v1401
    %v1407 = vmul.f32 %v155, %v1402
    %v1408 = vmul.f32 %v156, %v1403
    %v1409 = vrot.slane %v1401, 4
    %v1410 = vrot.slane %v1402, 4
    %v1411 = vrot.slane %v1403, 4
    %v1412 = vrot.slane %v1404, 4
    %v1413 = vsel %vm656, %v1411, %v1412
    %v1414 = vsel %vm656, %v1410, %v1411
    %v1415 = vsel %vm656, %v1409, %v1410
    %v1416 = vsel %vm656, %v1412, %v1409
    %v1417 = vmul.f32 %v141, %v1416
    %v1418 = vmul.f32 %v142, %v1415
    %v1419 = vmul.f32 %v143, %v1414
    %v1420 = vmul.f32 %v144, %v1413
    %1425 = vrot.lane.b32.xlu0 %v1417, 64
    %v1426 = vpop.permute.xlu0 %1425
    %1427 = vrot.lane.b32.xlu0 %v1418, 64
    %v1428 = vpop.permute.xlu0 %1427
    %1429 = vrot.lane.b32.xlu0 %v1419, 64
    %v1430 = vpop.permute.xlu0 %1429
    %1431 = vrot.lane.b32.xlu0 %v1420, 64
    %v1432 = vpop.permute.xlu0 %1431
    %v1437 = vsel %vm324, %v1405, %v1426
    %v1438 = vsel %vm324, %v1406, %v1428
    %v1439 = vsel %vm324, %v1407, %v1430
    %v1440 = vsel %vm324, %v1408, %v1432
    %s1441 = scalar_lea.vmem %s3, 576
    %v1442 = vld [vmem:[%s1441] sm:$0xff]
    %v1443 = vld [vmem:[%s1441 + $0x8] sm:$0xff]
    %v1444 = vld [vmem:[%s1441 + $0x10] sm:$0xff]
    %v1445 = vld [vmem:[%s1441 + $0x18] sm:$0xff]
    %v1446 = vld [vmem:[%s1441 + $0x20] sm:$0xff]
    %v1447 = vld [vmem:[%s1441 + $0x28] sm:$0xff]
    %v1448 = vld [vmem:[%s1441 + $0x30] sm:$0xff]
    %v1449 = vld [vmem:[%s1441 + $0x38] sm:$0xff]
    %v1450 = vld [vmem:[%s1441 + $0x40] sm:$0xff]
    %v1451 = vld [vmem:[%s1441 + $0x48] sm:$0xff]
    %v1452 = vld [vmem:[%s1441 + $0x50] sm:$0xff]
    %v1453 = vld [vmem:[%s1441 + $0x58] sm:$0xff]
    %v1454 = vld [vmem:[%s1441 + $0x60] sm:$0xff]
    %v1455 = vld [vmem:[%s1441 + $0x68] sm:$0xff]
    %v1456 = vld [vmem:[%s1441 + $0x70] sm:$0xff]
    %v1457 = vld [vmem:[%s1441 + $0x78] sm:$0xff]
    %v1458 = vld [vmem:[%s1441 + $0x80] sm:$0xff]
    %v1459 = vld [vmem:[%s1441 + $0x88] sm:$0xff]
    %v1460 = vld [vmem:[%s1441 + $0x90] sm:$0xff]
    %v1461 = vld [vmem:[%s1441 + $0x98] sm:$0xff]
    %v1462 = vld [vmem:[%s1441 + $0xa0] sm:$0xff]
    %v1463 = vld [vmem:[%s1441 + $0xa8] sm:$0xff]
    %v1464 = vld [vmem:[%s1441 + $0xb0] sm:$0xff]
    %v1465 = vld [vmem:[%s1441 + $0xb8] sm:$0xff]
    %s1466 = scalar_lea.vmem %s4, 3
    %v1467 = vld [vmem:[%s1466] sm:$0x1]
    %v1469 = vlaneseq
    %v1470 = vshrl.u32 %v1469, 7
    %v1471 = vsub.s32 0, %v1470
    %v1472 = vrot.slane %v1467, %v1471
    %v1475 = vsel %vm324, %v1401, 0
    %v1478 = vsel %vm324, %v1402, 0
    %v1481 = vsel %vm324, %v1403, 0
    %v1484 = vsel %vm324, %v1404, 0
    %1486 = vmatprep.subr.mxu0 0.0
    %1487 = vmatpush1.msra.mxu0 %v1457
    %1488 = vmatprep.subr.mxu0 0.0
    %1489 = vmatpush1.msra.mxu0 %v1456
    %1490 = vmatprep.subr.mxu0 0.0
    %1491 = vmatpush1.msra.mxu0 %v1455
    %1492 = vmatprep.subr.mxu0 0.0
    %1493 = vmatpush1.msra.mxu0 %v1454
    %1494 = vmatprep.subr.mxu0 0.0
    %1495 = vmatpush1.msra.mxu0 %v1453
    %1496 = vmatprep.subr.mxu0 0.0
    %1497 = vmatpush1.msra.mxu0 %v1452
    %1498 = vmatprep.subr.mxu0 0.0
    %1499 = vmatpush1.msra.mxu0 %v1451
    %1500 = vmatprep.subr.mxu0 0.0
    %1501 = vmatpush1.msra.mxu0 %v1450
    %1502 = vmatprep.subr.mxu0 0.0
    %1503 = vmatpush1.msra.mxu0 %v1449
    %1504 = vmatprep.subr.mxu0 0.0
    %1505 = vmatpush1.msra.mxu0 %v1448
    %1506 = vmatprep.subr.mxu0 0.0
    %1507 = vmatpush1.msra.mxu0 %v1447
    %1508 = vmatprep.subr.mxu0 0.0
    %1509 = vmatpush1.msra.mxu0 %v1446
    %1510 = vmatprep.subr.mxu0 0.0
    %1511 = vmatpush1.msra.mxu0 %v1445
    %1512 = vmatprep.subr.mxu0 0.0
    %1513 = vmatpush1.msra.mxu0 %v1444
    %1514 = vmatprep.subr.mxu0 0.0
    %1515 = vmatpush1.msra.mxu0 %v1443
    %1516 = vmatprep.subr.mxu0 0.0
    %1517 = vmatpush1.msra.mxu0 %v1442
    %1518 = vmatprep.subr.mxu0 0.0
    %1519 = vmatpush2.msra.mxu0 0.0
    %1520 = vmatprep.subr.mxu0 0.0
    %1521 = vmatpush2.msra.mxu0 0.0
    %1522 = vmatprep.subr.mxu0 0.0
    %1523 = vmatpush2.msra.mxu0 0.0
    %1524 = vmatprep.subr.mxu0 0.0
    %1525 = vmatpush2.msra.mxu0 0.0
    %1526 = vmatprep.subr.mxu0 0.0
    %1527 = vmatpush2.msra.mxu0 0.0
    %1528 = vmatprep.subr.mxu0 0.0
    %1529 = vmatpush2.msra.mxu0 0.0
    %1530 = vmatprep.subr.mxu0 0.0
    %1531 = vmatpush2.msra.mxu0 0.0
    %1532 = vmatprep.subr.mxu0 0.0
    %1533 = vmatpush2.msra.mxu0 0.0
    %1534 = vmatprep.subr.mxu0 0.0
    %1535 = vmatpush2.msra.mxu0 %v1465
    %1536 = vmatprep.subr.mxu0 0.0
    %1537 = vmatpush2.msra.mxu0 %v1464
    %1538 = vmatprep.subr.mxu0 0.0
    %1539 = vmatpush2.msra.mxu0 %v1463
    %1540 = vmatprep.subr.mxu0 0.0
    %1541 = vmatpush2.msra.mxu0 %v1462
    %1542 = vmatprep.subr.mxu0 0.0
    %1543 = vmatpush2.msra.mxu0 %v1461
    %1544 = vmatprep.subr.mxu0 0.0
    %1545 = vmatpush2.msra.mxu0 %v1460
    %1546 = vmatprep.subr.mxu0 0.0
    %1547 = vmatpush2.msra.mxu0 %v1459
    %1548 = vmatprep.subr.mxu0 0.0
    %1549 = vmatpush2.msra.mxu0 %v1458
    %1550 = vmatprep.mubr.f32.mxu0 %v1475
    %1551 = vmatmul.mubr.f32.gmra.mxu0 %v1437
    %v1552 = vpop.f32.mrf.mxu0
    %v1553 = vadd.f32 %v1472, %v1552
    %v1554 = vpop.f32.mrf.mxu0
    %1555 = vmatprep.mubr.f32.mxu0 %v1478
    %1556 = vmatmul.mubr.f32.gmra.mxu0 %v1438
    %v1557 = vpop.f32.mrf.mxu0
    %v1558 = vadd.f32 %v1472, %v1557
    %v1559 = vpop.f32.mrf.mxu0
    %1560 = vmatprep.mubr.f32.mxu0 %v1481
    %1561 = vmatmul.mubr.f32.gmra.mxu0 %v1439
    %v1562 = vpop.f32.mrf.mxu0
    %v1563 = vadd.f32 %v1472, %v1562
    %v1564 = vpop.f32.mrf.mxu0
    %1565 = vmatprep.mubr.f32.mxu0 %v1484
    %1566 = vmatmul.mubr.f32.gmra.mxu0 %v1440
    %v1567 = vpop.f32.mrf.mxu0
    %v1568 = vadd.f32 %v1472, %v1567
    %v1569 = vpop.f32.mrf.mxu0
    %1570 = vdwg.mxu0
    %v1571 = vmul.f32 %v1553, %v1553
    %v1572 = vmul.f32 %v1558, %v1558
    %v1573 = vmul.f32 %v1563, %v1563
    %v1574 = vmul.f32 %v1568, %v1568
    %1579 = vrot.lane.b32.xlu0 %v1571, 64
    %v1580 = vpop.permute.xlu0 %1579
    %1581 = vrot.lane.b32.xlu0 %v1572, 64
    %v1582 = vpop.permute.xlu0 %1581
    %1583 = vrot.lane.b32.xlu0 %v1573, 64
    %v1584 = vpop.permute.xlu0 %1583
    %1585 = vrot.lane.b32.xlu0 %v1574, 64
    %v1586 = vpop.permute.xlu0 %1585
    %v1591 = vsel %vm324, %v1553, %v1580
    %v1592 = vsel %vm324, %v1558, %v1582
    %v1593 = vsel %vm324, %v1563, %v1584
    %v1594 = vsel %vm324, %v1568, %v1586
    %1595 = vmatprep.subr.mxu0 0.0
    %1596 = vmatpush1.msra.mxu0 %v172
    %1597 = vmatprep.subr.mxu0 0.0
    %1598 = vmatpush1.msra.mxu0 %v171
    %1599 = vmatprep.subr.mxu0 0.0
    %1600 = vmatpush1.msra.mxu0 %v170
    %1601 = vmatprep.subr.mxu0 0.0
    %1602 = vmatpush1.msra.mxu0 %v169
    %1603 = vmatprep.subr.mxu0 0.0
    %1604 = vmatpush1.msra.mxu0 %v168
    %1605 = vmatprep.subr.mxu0 0.0
    %1606 = vmatpush1.msra.mxu0 %v167
    %1607 = vmatprep.subr.mxu0 0.0
    %1608 = vmatpush1.msra.mxu0 %v166
    %1609 = vmatprep.subr.mxu0 0.0
    %1610 = vmatpush1.msra.mxu0 %v165
    %1611 = vmatprep.subr.mxu0 0.0
    %1612 = vmatpush1.msra.mxu0 %v164
    %1613 = vmatprep.subr.mxu0 0.0
    %1614 = vmatpush1.msra.mxu0 %v163
    %1615 = vmatprep.subr.mxu0 0.0
    %1616 = vmatpush1.msra.mxu0 %v162
    %1617 = vmatprep.subr.mxu0 0.0
    %1618 = vmatpush1.msra.mxu0 %v161
    %1619 = vmatprep.subr.mxu0 0.0
    %1620 = vmatpush1.msra.mxu0 %v160
    %1621 = vmatprep.subr.mxu0 0.0
    %1622 = vmatpush1.msra.mxu0 %v159
    %1623 = vmatprep.subr.mxu0 0.0
    %1624 = vmatpush1.msra.mxu0 %v158
    %1625 = vmatprep.subr.mxu0 0.0
    %1626 = vmatpush1.msra.mxu0 %v157
    %1627 = vmatprep.subr.mxu0 0.0
    %1628 = vmatpush2.msra.mxu0 0.0
    %1629 = vmatprep.subr.mxu0 0.0
    %1630 = vmatpush2.msra.mxu0 0.0
    %1631 = vmatprep.subr.mxu0 0.0
    %1632 = vmatpush2.msra.mxu0 0.0
    %1633 = vmatprep.subr.mxu0 0.0
    %1634 = vmatpush2.msra.mxu0 0.0
    %1635 = vmatprep.subr.mxu0 0.0
    %1636 = vmatpush2.msra.mxu0 0.0
    %1637 = vmatprep.subr.mxu0 0.0
    %1638 = vmatpush2.msra.mxu0 0.0
    %1639 = vmatprep.subr.mxu0 0.0
    %1640 = vmatpush2.msra.mxu0 0.0
    %1641 = vmatprep.subr.mxu0 0.0
    %1642 = vmatpush2.msra.mxu0 0.0
    %1643 = vmatprep.subr.mxu0 0.0
    %1644 = vmatpush2.msra.mxu0 0.0
    %1645 = vmatprep.subr.mxu0 0.0
    %1646 = vmatpush2.msra.mxu0 0.0
    %1647 = vmatprep.subr.mxu0 0.0
    %1648 = vmatpush2.msra.mxu0 0.0
    %1649 = vmatprep.subr.mxu0 0.0
    %1650 = vmatpush2.msra.mxu0 0.0
    %1651 = vmatprep.subr.mxu0 0.0
    %1652 = vmatpush2.msra.mxu0 0.0
    %1653 = vmatprep.subr.mxu0 0.0
    %1654 = vmatpush2.msra.mxu0 0.0
    %1655 = vmatprep.subr.mxu0 0.0
    %1656 = vmatpush2.msra.mxu0 0.0
    %1657 = vmatprep.subr.mxu0 0.0
    %1658 = vmatpush2.msra.mxu0 0.0
    %1659 = vmatprep.mubr.f32.mxu0 0.0
    %1660 = vmatmul.mubr.f32.gmra.mxu0 %v1591
    %v1661 = vpop.f32.mrf.mxu0
    %v1662 = vadd.f32 0.0, %v1661
    %v1663 = vpop.f32.mrf.mxu0
    %1664 = vmatprep.mubr.f32.mxu0 0.0
    %1665 = vmatmul.mubr.f32.gmra.mxu0 %v1592
    %v1666 = vpop.f32.mrf.mxu0
    %v1667 = vadd.f32 0.0, %v1666
    %v1668 = vpop.f32.mrf.mxu0
    %1669 = vmatprep.mubr.f32.mxu0 0.0
    %1670 = vmatmul.mubr.f32.gmra.mxu0 %v1593
    %v1671 = vpop.f32.mrf.mxu0
    %v1672 = vadd.f32 0.0, %v1671
    %v1673 = vpop.f32.mrf.mxu0
    %1674 = vmatprep.mubr.f32.mxu0 0.0
    %1675 = vmatmul.mubr.f32.gmra.mxu0 %v1594
    %v1676 = vpop.f32.mrf.mxu0
    %v1677 = vadd.f32 0.0, %v1676
    %v1678 = vpop.f32.mrf.mxu0
    %1679 = vdwg.mxu0
    %v1680 = vmul.f32 %v1662, %v1662
    %v1681 = vmul.f32 %v1667, %v1667
    %v1682 = vmul.f32 %v1672, %v1672
    %v1683 = vmul.f32 %v1677, %v1677
    %1688 = vrot.lane.b32.xlu0 %v1680, 64
    %v1689 = vpop.permute.xlu0 %1688
    %1690 = vrot.lane.b32.xlu0 %v1681, 64
    %v1691 = vpop.permute.xlu0 %1690
    %1692 = vrot.lane.b32.xlu0 %v1682, 64
    %v1693 = vpop.permute.xlu0 %1692
    %1694 = vrot.lane.b32.xlu0 %v1683, 64
    %v1695 = vpop.permute.xlu0 %1694
    %v1700 = vsub.f32 %v1662, %v1689
    %v1701 = vsub.f32 %v1667, %v1691
    %v1702 = vsub.f32 %v1672, %v1693
    %v1703 = vsub.f32 %v1677, %v1695
    %v1704 = vmax.f32 %v1700, 0.0
    %v1705 = vmax.f32 %v1701, 0.0
    %v1706 = vmax.f32 %v1702, 0.0
    %v1707 = vmax.f32 %v1703, 0.0
    %v1708 = vsub.f32 %v1553, %v1662
    %v1709 = vsub.f32 %v1558, %v1667
    %v1710 = vsub.f32 %v1563, %v1672
    %v1711 = vsub.f32 %v1568, %v1677
    %v1712 = vadd.f32 %v1704, 1e-08
    %v1713 = vadd.f32 %v1705, 1e-08
    %v1714 = vadd.f32 %v1706, 1e-08
    %v1715 = vadd.f32 %v1707, 1e-08
    %v1716 = vrsqrt.pop %v1712
    %v1717 = vrsqrt.pop %v1713
    %v1718 = vrsqrt.pop %v1714
    %v1719 = vrsqrt.pop %v1715
    %1724 = vrot.lane.b32.xlu0 %v1716, 64
    %v1725 = vpop.permute.xlu0 %1724
    %1726 = vrot.lane.b32.xlu0 %v1717, 64
    %v1727 = vpop.permute.xlu0 %1726
    %1728 = vrot.lane.b32.xlu0 %v1718, 64
    %v1729 = vpop.permute.xlu0 %1728
    %1730 = vrot.lane.b32.xlu0 %v1719, 64
    %v1731 = vpop.permute.xlu0 %1730
    %v1736 = vmul.f32 %v1708, %v1725
    %v1737 = vmul.f32 %v1709, %v1727
    %v1738 = vmul.f32 %v1710, %v1729
    %v1739 = vmul.f32 %v1711, %v1731
    %s1740 = scalar_lea.vmem %s5, 3
    %v1741 = vld [vmem:[%s1740] sm:$0x1]
    %v1743 = vlaneseq
    %v1744 = vshrl.u32 %v1743, 7
    %v1745 = vsub.s32 0, %v1744
    %v1746 = vrot.slane %v1741, %v1745
    %v1748 = vmul.f32 %v1736, %v1746
    %v1749 = vmul.f32 %v1737, %v1746
    %v1750 = vmul.f32 %v1738, %v1746
    %v1751 = vmul.f32 %v1739, %v1746
    %s1752 = scalar_lea.vmem %s6, 3
    %v1753 = vld [vmem:[%s1752] sm:$0x1]
    %v1755 = vlaneseq
    %v1756 = vshrl.u32 %v1755, 7
    %v1757 = vsub.s32 0, %v1756
    %v1758 = vrot.slane %v1753, %v1757
    %v1760 = vadd.f32 %v1748, %v1758
    %v1761 = vadd.f32 %v1749, %v1758
    %v1762 = vadd.f32 %v1750, %v1758
    %v1763 = vadd.f32 %v1751, %v1758
    %v1764 = vmax.f32 %v1760, 0.0
    %v1765 = vmax.f32 %v1761, 0.0
    %v1766 = vmax.f32 %v1762, 0.0
    %v1767 = vmax.f32 %v1763, 0.0
    %s1768 = sld [smem:[#allocation2 + $0x1]]
    %v1769 = vstv %s1768
    %v1770 = vmul.f32 %v1769, %v1764
    %v1771 = vmul.f32 %v1769, %v1765
    %v1772 = vmul.f32 %v1769, %v1766
    %v1773 = vmul.f32 %v1769, %v1767
    %v1774 = vadd.f32 %v1770, %v1030
    %v1775 = vadd.f32 %v1771, %v1031
    %v1776 = vadd.f32 %v1772, %v1032
    %v1777 = vadd.f32 %v1773, %v1033
    %v1778 = vmul.f32 %v153, %v1777
    %v1779 = vmul.f32 %v154, %v1774
    %v1780 = vmul.f32 %v155, %v1775
    %v1781 = vmul.f32 %v156, %v1776
    %v1782 = vrot.slane %v1774, 4
    %v1783 = vrot.slane %v1775, 4
    %v1784 = vrot.slane %v1776, 4
    %v1785 = vrot.slane %v1777, 4
    %v1786 = vsel %vm656, %v1784, %v1785
    %v1787 = vsel %vm656, %v1783, %v1784
    %v1788 = vsel %vm656, %v1782, %v1783
    %v1789 = vsel %vm656, %v1785, %v1782
    %v1790 = vmul.f32 %v141, %v1789
    %v1791 = vmul.f32 %v142, %v1788
    %v1792 = vmul.f32 %v143, %v1787
    %v1793 = vmul.f32 %v144, %v1786
    %1798 = vrot.lane.b32.xlu0 %v1790, 64
    %v1799 = vpop.permute.xlu0 %1798
    %1800 = vrot.lane.b32.xlu0 %v1791, 64
    %v1801 = vpop.permute.xlu0 %1800
    %1802 = vrot.lane.b32.xlu0 %v1792, 64
    %v1803 = vpop.permute.xlu0 %1802
    %1804 = vrot.lane.b32.xlu0 %v1793, 64
    %v1805 = vpop.permute.xlu0 %1804
    %v1810 = vsel %vm324, %v1778, %v1799
    %v1811 = vsel %vm324, %v1779, %v1801
    %v1812 = vsel %vm324, %v1780, %v1803
    %v1813 = vsel %vm324, %v1781, %v1805
    %s1814 = scalar_lea.vmem %s3, 768
    %v1815 = vld [vmem:[%s1814] sm:$0xff]
    %v1816 = vld [vmem:[%s1814 + $0x8] sm:$0xff]
    %v1817 = vld [vmem:[%s1814 + $0x10] sm:$0xff]
    %v1818 = vld [vmem:[%s1814 + $0x18] sm:$0xff]
    %v1819 = vld [vmem:[%s1814 + $0x20] sm:$0xff]
    %v1820 = vld [vmem:[%s1814 + $0x28] sm:$0xff]
    %v1821 = vld [vmem:[%s1814 + $0x30] sm:$0xff]
    %v1822 = vld [vmem:[%s1814 + $0x38] sm:$0xff]
    %v1823 = vld [vmem:[%s1814 + $0x40] sm:$0xff]
    %v1824 = vld [vmem:[%s1814 + $0x48] sm:$0xff]
    %v1825 = vld [vmem:[%s1814 + $0x50] sm:$0xff]
    %v1826 = vld [vmem:[%s1814 + $0x58] sm:$0xff]
    %v1827 = vld [vmem:[%s1814 + $0x60] sm:$0xff]
    %v1828 = vld [vmem:[%s1814 + $0x68] sm:$0xff]
    %v1829 = vld [vmem:[%s1814 + $0x70] sm:$0xff]
    %v1830 = vld [vmem:[%s1814 + $0x78] sm:$0xff]
    %v1831 = vld [vmem:[%s1814 + $0x80] sm:$0xff]
    %v1832 = vld [vmem:[%s1814 + $0x88] sm:$0xff]
    %v1833 = vld [vmem:[%s1814 + $0x90] sm:$0xff]
    %v1834 = vld [vmem:[%s1814 + $0x98] sm:$0xff]
    %v1835 = vld [vmem:[%s1814 + $0xa0] sm:$0xff]
    %v1836 = vld [vmem:[%s1814 + $0xa8] sm:$0xff]
    %v1837 = vld [vmem:[%s1814 + $0xb0] sm:$0xff]
    %v1838 = vld [vmem:[%s1814 + $0xb8] sm:$0xff]
    %s1839 = scalar_lea.vmem %s4, 4
    %v1840 = vld [vmem:[%s1839] sm:$0x1]
    %v1842 = vlaneseq
    %v1843 = vshrl.u32 %v1842, 7
    %v1844 = vsub.s32 0, %v1843
    %v1845 = vrot.slane %v1840, %v1844
    %v1848 = vsel %vm324, %v1774, 0
    %v1851 = vsel %vm324, %v1775, 0
    %v1854 = vsel %vm324, %v1776, 0
    %v1857 = vsel %vm324, %v1777, 0
    %1859 = vmatprep.subr.mxu0 0.0
    %1860 = vmatpush1.msra.mxu0 %v1830
    %1861 = vmatprep.subr.mxu0 0.0
    %1862 = vmatpush1.msra.mxu0 %v1829
    %1863 = vmatprep.subr.mxu0 0.0
    %1864 = vmatpush1.msra.mxu0 %v1828
    %1865 = vmatprep.subr.mxu0 0.0
    %1866 = vmatpush1.msra.mxu0 %v1827
    %1867 = vmatprep.subr.mxu0 0.0
    %1868 = vmatpush1.msra.mxu0 %v1826
    %1869 = vmatprep.subr.mxu0 0.0
    %1870 = vmatpush1.msra.mxu0 %v1825
    %1871 = vmatprep.subr.mxu0 0.0
    %1872 = vmatpush1.msra.mxu0 %v1824
    %1873 = vmatprep.subr.mxu0 0.0
    %1874 = vmatpush1.msra.mxu0 %v1823
    %1875 = vmatprep.subr.mxu0 0.0
    %1876 = vmatpush1.msra.mxu0 %v1822
    %1877 = vmatprep.subr.mxu0 0.0
    %1878 = vmatpush1.msra.mxu0 %v1821
    %1879 = vmatprep.subr.mxu0 0.0
    %1880 = vmatpush1.msra.mxu0 %v1820
    %1881 = vmatprep.subr.mxu0 0.0
    %1882 = vmatpush1.msra.mxu0 %v1819
    %1883 = vmatprep.subr.mxu0 0.0
    %1884 = vmatpush1.msra.mxu0 %v1818
    %1885 = vmatprep.subr.mxu0 0.0
    %1886 = vmatpush1.msra.mxu0 %v1817
    %1887 = vmatprep.subr.mxu0 0.0
    %1888 = vmatpush1.msra.mxu0 %v1816
    %1889 = vmatprep.subr.mxu0 0.0
    %1890 = vmatpush1.msra.mxu0 %v1815
    %1891 = vmatprep.subr.mxu0 0.0
    %1892 = vmatpush2.msra.mxu0 0.0
    %1893 = vmatprep.subr.mxu0 0.0
    %1894 = vmatpush2.msra.mxu0 0.0
    %1895 = vmatprep.subr.mxu0 0.0
    %1896 = vmatpush2.msra.mxu0 0.0
    %1897 = vmatprep.subr.mxu0 0.0
    %1898 = vmatpush2.msra.mxu0 0.0
    %1899 = vmatprep.subr.mxu0 0.0
    %1900 = vmatpush2.msra.mxu0 0.0
    %1901 = vmatprep.subr.mxu0 0.0
    %1902 = vmatpush2.msra.mxu0 0.0
    %1903 = vmatprep.subr.mxu0 0.0
    %1904 = vmatpush2.msra.mxu0 0.0
    %1905 = vmatprep.subr.mxu0 0.0
    %1906 = vmatpush2.msra.mxu0 0.0
    %1907 = vmatprep.subr.mxu0 0.0
    %1908 = vmatpush2.msra.mxu0 %v1838
    %1909 = vmatprep.subr.mxu0 0.0
    %1910 = vmatpush2.msra.mxu0 %v1837
    %1911 = vmatprep.subr.mxu0 0.0
    %1912 = vmatpush2.msra.mxu0 %v1836
    %1913 = vmatprep.subr.mxu0 0.0
    %1914 = vmatpush2.msra.mxu0 %v1835
    %1915 = vmatprep.subr.mxu0 0.0
    %1916 = vmatpush2.msra.mxu0 %v1834
    %1917 = vmatprep.subr.mxu0 0.0
    %1918 = vmatpush2.msra.mxu0 %v1833
    %1919 = vmatprep.subr.mxu0 0.0
    %1920 = vmatpush2.msra.mxu0 %v1832
    %1921 = vmatprep.subr.mxu0 0.0
    %1922 = vmatpush2.msra.mxu0 %v1831
    %1923 = vmatprep.mubr.f32.mxu0 %v1848
    %1924 = vmatmul.mubr.f32.gmra.mxu0 %v1810
    %v1925 = vpop.f32.mrf.mxu0
    %v1926 = vadd.f32 %v1845, %v1925
    %v1927 = vpop.f32.mrf.mxu0
    %1928 = vmatprep.mubr.f32.mxu0 %v1851
    %1929 = vmatmul.mubr.f32.gmra.mxu0 %v1811
    %v1930 = vpop.f32.mrf.mxu0
    %v1931 = vadd.f32 %v1845, %v1930
    %v1932 = vpop.f32.mrf.mxu0
    %1933 = vmatprep.mubr.f32.mxu0 %v1854
    %1934 = vmatmul.mubr.f32.gmra.mxu0 %v1812
    %v1935 = vpop.f32.mrf.mxu0
    %v1936 = vadd.f32 %v1845, %v1935
    %v1937 = vpop.f32.mrf.mxu0
    %1938 = vmatprep.mubr.f32.mxu0 %v1857
    %1939 = vmatmul.mubr.f32.gmra.mxu0 %v1813
    %v1940 = vpop.f32.mrf.mxu0
    %v1941 = vadd.f32 %v1845, %v1940
    %v1942 = vpop.f32.mrf.mxu0
    %1943 = vdwg.mxu0
    %v1944 = vmul.f32 %v1926, %v1926
    %v1945 = vmul.f32 %v1931, %v1931
    %v1946 = vmul.f32 %v1936, %v1936
    %v1947 = vmul.f32 %v1941, %v1941
    %1952 = vrot.lane.b32.xlu0 %v1944, 64
    %v1953 = vpop.permute.xlu0 %1952
    %1954 = vrot.lane.b32.xlu0 %v1945, 64
    %v1955 = vpop.permute.xlu0 %1954
    %1956 = vrot.lane.b32.xlu0 %v1946, 64
    %v1957 = vpop.permute.xlu0 %1956
    %1958 = vrot.lane.b32.xlu0 %v1947, 64
    %v1959 = vpop.permute.xlu0 %1958
    %v1964 = vsel %vm324, %v1926, %v1953
    %v1965 = vsel %vm324, %v1931, %v1955
    %v1966 = vsel %vm324, %v1936, %v1957
    %v1967 = vsel %vm324, %v1941, %v1959
    %1968 = vmatprep.subr.mxu0 0.0
    %1969 = vmatpush1.msra.mxu0 %v172
    %1970 = vmatprep.subr.mxu0 0.0
    %1971 = vmatpush1.msra.mxu0 %v171
    %1972 = vmatprep.subr.mxu0 0.0
    %1973 = vmatpush1.msra.mxu0 %v170
    %1974 = vmatprep.subr.mxu0 0.0
    %1975 = vmatpush1.msra.mxu0 %v169
    %1976 = vmatprep.subr.mxu0 0.0
    %1977 = vmatpush1.msra.mxu0 %v168
    %1978 = vmatprep.subr.mxu0 0.0
    %1979 = vmatpush1.msra.mxu0 %v167
    %1980 = vmatprep.subr.mxu0 0.0
    %1981 = vmatpush1.msra.mxu0 %v166
    %1982 = vmatprep.subr.mxu0 0.0
    %1983 = vmatpush1.msra.mxu0 %v165
    %1984 = vmatprep.subr.mxu0 0.0
    %1985 = vmatpush1.msra.mxu0 %v164
    %1986 = vmatprep.subr.mxu0 0.0
    %1987 = vmatpush1.msra.mxu0 %v163
    %1988 = vmatprep.subr.mxu0 0.0
    %1989 = vmatpush1.msra.mxu0 %v162
    %1990 = vmatprep.subr.mxu0 0.0
    %1991 = vmatpush1.msra.mxu0 %v161
    %1992 = vmatprep.subr.mxu0 0.0
    %1993 = vmatpush1.msra.mxu0 %v160
    %1994 = vmatprep.subr.mxu0 0.0
    %1995 = vmatpush1.msra.mxu0 %v159
    %1996 = vmatprep.subr.mxu0 0.0
    %1997 = vmatpush1.msra.mxu0 %v158
    %1998 = vmatprep.subr.mxu0 0.0
    %1999 = vmatpush1.msra.mxu0 %v157
    %2000 = vmatprep.subr.mxu0 0.0
    %2001 = vmatpush2.msra.mxu0 0.0
    %2002 = vmatprep.subr.mxu0 0.0
    %2003 = vmatpush2.msra.mxu0 0.0
    %2004 = vmatprep.subr.mxu0 0.0
    %2005 = vmatpush2.msra.mxu0 0.0
    %2006 = vmatprep.subr.mxu0 0.0
    %2007 = vmatpush2.msra.mxu0 0.0
    %2008 = vmatprep.subr.mxu0 0.0
    %2009 = vmatpush2.msra.mxu0 0.0
    %2010 = vmatprep.subr.mxu0 0.0
    %2011 = vmatpush2.msra.mxu0 0.0
    %2012 = vmatprep.subr.mxu0 0.0
    %2013 = vmatpush2.msra.mxu0 0.0
    %2014 = vmatprep.subr.mxu0 0.0
    %2015 = vmatpush2.msra.mxu0 0.0
    %2016 = vmatprep.subr.mxu0 0.0
    %2017 = vmatpush2.msra.mxu0 0.0
    %2018 = vmatprep.subr.mxu0 0.0
    %2019 = vmatpush2.msra.mxu0 0.0
    %2020 = vmatprep.subr.mxu0 0.0
    %2021 = vmatpush2.msra.mxu0 0.0
    %2022 = vmatprep.subr.mxu0 0.0
    %2023 = vmatpush2.msra.mxu0 0.0
    %2024 = vmatprep.subr.mxu0 0.0
    %2025 = vmatpush2.msra.mxu0 0.0
    %2026 = vmatprep.subr.mxu0 0.0
    %2027 = vmatpush2.msra.mxu0 0.0
    %2028 = vmatprep.subr.mxu0 0.0
    %2029 = vmatpush2.msra.mxu0 0.0
    %2030 = vmatprep.subr.mxu0 0.0
    %2031 = vmatpush2.msra.mxu0 0.0
    %2032 = vmatprep.mubr.f32.mxu0 0.0
    %2033 = vmatmul.mubr.f32.gmra.mxu0 %v1964
    %v2034 = vpop.f32.mrf.mxu0
    %v2035 = vadd.f32 0.0, %v2034
    %v2036 = vpop.f32.mrf.mxu0
    %2037 = vmatprep.mubr.f32.mxu0 0.0
    %2038 = vmatmul.mubr.f32.gmra.mxu0 %v1965
    %v2039 = vpop.f32.mrf.mxu0
    %v2040 = vadd.f32 0.0, %v2039
    %v2041 = vpop.f32.mrf.mxu0
    %2042 = vmatprep.mubr.f32.mxu0 0.0
    %2043 = vmatmul.mubr.f32.gmra.mxu0 %v1966
    %v2044 = vpop.f32.mrf.mxu0
    %v2045 = vadd.f32 0.0, %v2044
    %v2046 = vpop.f32.mrf.mxu0
    %2047 = vmatprep.mubr.f32.mxu0 0.0
    %2048 = vmatmul.mubr.f32.gmra.mxu0 %v1967
    %v2049 = vpop.f32.mrf.mxu0
    %v2050 = vadd.f32 0.0, %v2049
    %v2051 = vpop.f32.mrf.mxu0
    %2052 = vdwg.mxu0
    %v2053 = vmul.f32 %v2035, %v2035
    %v2054 = vmul.f32 %v2040, %v2040
    %v2055 = vmul.f32 %v2045, %v2045
    %v2056 = vmul.f32 %v2050, %v2050
    %2061 = vrot.lane.b32.xlu0 %v2053, 64
    %v2062 = vpop.permute.xlu0 %2061
    %2063 = vrot.lane.b32.xlu0 %v2054, 64
    %v2064 = vpop.permute.xlu0 %2063
    %2065 = vrot.lane.b32.xlu0 %v2055, 64
    %v2066 = vpop.permute.xlu0 %2065
    %2067 = vrot.lane.b32.xlu0 %v2056, 64
    %v2068 = vpop.permute.xlu0 %2067
    %v2073 = vsub.f32 %v2035, %v2062
    %v2074 = vsub.f32 %v2040, %v2064
    %v2075 = vsub.f32 %v2045, %v2066
    %v2076 = vsub.f32 %v2050, %v2068
    %v2077 = vmax.f32 %v2073, 0.0
    %v2078 = vmax.f32 %v2074, 0.0
    %v2079 = vmax.f32 %v2075, 0.0
    %v2080 = vmax.f32 %v2076, 0.0
    %v2081 = vsub.f32 %v1926, %v2035
    %v2082 = vsub.f32 %v1931, %v2040
    %v2083 = vsub.f32 %v1936, %v2045
    %v2084 = vsub.f32 %v1941, %v2050
    %v2085 = vadd.f32 %v2077, 1e-08
    %v2086 = vadd.f32 %v2078, 1e-08
    %v2087 = vadd.f32 %v2079, 1e-08
    %v2088 = vadd.f32 %v2080, 1e-08
    %v2089 = vrsqrt.pop %v2085
    %v2090 = vrsqrt.pop %v2086
    %v2091 = vrsqrt.pop %v2087
    %v2092 = vrsqrt.pop %v2088
    %2097 = vrot.lane.b32.xlu0 %v2089, 64
    %v2098 = vpop.permute.xlu0 %2097
    %2099 = vrot.lane.b32.xlu0 %v2090, 64
    %v2100 = vpop.permute.xlu0 %2099
    %2101 = vrot.lane.b32.xlu0 %v2091, 64
    %v2102 = vpop.permute.xlu0 %2101
    %2103 = vrot.lane.b32.xlu0 %v2092, 64
    %v2104 = vpop.permute.xlu0 %2103
    %v2109 = vmul.f32 %v2081, %v2098
    %v2110 = vmul.f32 %v2082, %v2100
    %v2111 = vmul.f32 %v2083, %v2102
    %v2112 = vmul.f32 %v2084, %v2104
    %s2113 = scalar_lea.vmem %s5, 4
    %v2114 = vld [vmem:[%s2113] sm:$0x1]
    %v2116 = vlaneseq
    %v2117 = vshrl.u32 %v2116, 7
    %v2118 = vsub.s32 0, %v2117
    %v2119 = vrot.slane %v2114, %v2118
    %v2121 = vmul.f32 %v2109, %v2119
    %v2122 = vmul.f32 %v2110, %v2119
    %v2123 = vmul.f32 %v2111, %v2119
    %v2124 = vmul.f32 %v2112, %v2119
    %s2125 = scalar_lea.vmem %s6, 4
    %v2126 = vld [vmem:[%s2125] sm:$0x1]
    %v2128 = vlaneseq
    %v2129 = vshrl.u32 %v2128, 7
    %v2130 = vsub.s32 0, %v2129
    %v2131 = vrot.slane %v2126, %v2130
    %v2133 = vadd.f32 %v2121, %v2131
    %v2134 = vadd.f32 %v2122, %v2131
    %v2135 = vadd.f32 %v2123, %v2131
    %v2136 = vadd.f32 %v2124, %v2131
    %v2137 = vmax.f32 %v2133, 0.0
    %v2138 = vmax.f32 %v2134, 0.0
    %v2139 = vmax.f32 %v2135, 0.0
    %v2140 = vmax.f32 %v2136, 0.0
    %v2141 = vmul.f32 %v153, %v2140
    %v2142 = vmul.f32 %v154, %v2137
    %v2143 = vmul.f32 %v155, %v2138
    %v2144 = vmul.f32 %v156, %v2139
    %2149 = vrot.lane.b32.xlu0 %v2141, 64
    %v2150 = vpop.permute.xlu0 %2149
    %2151 = vrot.lane.b32.xlu0 %v2142, 64
    %v2152 = vpop.permute.xlu0 %2151
    %2153 = vrot.lane.b32.xlu0 %v2143, 64
    %v2154 = vpop.permute.xlu0 %2153
    %2155 = vrot.lane.b32.xlu0 %v2144, 64
    %v2156 = vpop.permute.xlu0 %2155
    %v2161 = vsel %vm324, %v2137, %v2150
    %v2162 = vsel %vm324, %v2138, %v2152
    %v2163 = vsel %vm324, %v2139, %v2154
    %v2164 = vsel %vm324, %v2140, %v2156
    %s2165 = scalar_lea.vmem %s3, 960
    %v2166 = vld [vmem:[%s2165] sm:$0xff]
    %v2167 = vld [vmem:[%s2165 + $0x8] sm:$0xff]
    %v2168 = vld [vmem:[%s2165 + $0x10] sm:$0xff]
    %v2169 = vld [vmem:[%s2165 + $0x18] sm:$0xff]
    %v2170 = vld [vmem:[%s2165 + $0x20] sm:$0xff]
    %v2171 = vld [vmem:[%s2165 + $0x28] sm:$0xff]
    %v2172 = vld [vmem:[%s2165 + $0x30] sm:$0xff]
    %v2173 = vld [vmem:[%s2165 + $0x38] sm:$0xff]
    %v2174 = vld [vmem:[%s2165 + $0x40] sm:$0xff]
    %v2175 = vld [vmem:[%s2165 + $0x48] sm:$0xff]
    %v2176 = vld [vmem:[%s2165 + $0x50] sm:$0xff]
    %v2177 = vld [vmem:[%s2165 + $0x58] sm:$0xff]
    %v2178 = vld [vmem:[%s2165 + $0x60] sm:$0xff]
    %v2179 = vld [vmem:[%s2165 + $0x68] sm:$0xff]
    %v2180 = vld [vmem:[%s2165 + $0x70] sm:$0xff]
    %v2181 = vld [vmem:[%s2165 + $0x78] sm:$0xff]
    %v2182 = vld [vmem:[%s2165 + $0x80] sm:$0xff]
    %v2183 = vld [vmem:[%s2165 + $0x88] sm:$0xff]
    %v2184 = vld [vmem:[%s2165 + $0x90] sm:$0xff]
    %v2185 = vld [vmem:[%s2165 + $0x98] sm:$0xff]
    %v2186 = vld [vmem:[%s2165 + $0xa0] sm:$0xff]
    %v2187 = vld [vmem:[%s2165 + $0xa8] sm:$0xff]
    %v2188 = vld [vmem:[%s2165 + $0xb0] sm:$0xff]
    %v2189 = vld [vmem:[%s2165 + $0xb8] sm:$0xff]
    %s2190 = scalar_lea.vmem %s4, 5
    %v2191 = vld [vmem:[%s2190] sm:$0x1]
    %v2193 = vlaneseq
    %v2194 = vshrl.u32 %v2193, 7
    %v2195 = vsub.s32 0, %v2194
    %v2196 = vrot.slane %v2191, %v2195
    %v2199 = vsel %vm324, %v2137, 0
    %v2202 = vsel %vm324, %v2138, 0
    %v2205 = vsel %vm324, %v2139, 0
    %v2208 = vsel %vm324, %v2140, 0
    %2210 = vmatprep.subr.mxu0 0.0
    %2211 = vmatpush1.msra.mxu0 %v2181
    %2212 = vmatprep.subr.mxu0 0.0
    %2213 = vmatpush1.msra.mxu0 %v2180
    %2214 = vmatprep.subr.mxu0 0.0
    %2215 = vmatpush1.msra.mxu0 %v2179
    %2216 = vmatprep.subr.mxu0 0.0
    %2217 = vmatpush1.msra.mxu0 %v2178
    %2218 = vmatprep.subr.mxu0 0.0
    %2219 = vmatpush1.msra.mxu0 %v2177
    %2220 = vmatprep.subr.mxu0 0.0
    %2221 = vmatpush1.msra.mxu0 %v2176
    %2222 = vmatprep.subr.mxu0 0.0
    %2223 = vmatpush1.msra.mxu0 %v2175
    %2224 = vmatprep.subr.mxu0 0.0
    %2225 = vmatpush1.msra.mxu0 %v2174
    %2226 = vmatprep.subr.mxu0 0.0
    %2227 = vmatpush1.msra.mxu0 %v2173
    %2228 = vmatprep.subr.mxu0 0.0
    %2229 = vmatpush1.msra.mxu0 %v2172
    %2230 = vmatprep.subr.mxu0 0.0
    %2231 = vmatpush1.msra.mxu0 %v2171
    %2232 = vmatprep.subr.mxu0 0.0
    %2233 = vmatpush1.msra.mxu0 %v2170
    %2234 = vmatprep.subr.mxu0 0.0
    %2235 = vmatpush1.msra.mxu0 %v2169
    %2236 = vmatprep.subr.mxu0 0.0
    %2237 = vmatpush1.msra.mxu0 %v2168
    %2238 = vmatprep.subr.mxu0 0.0
    %2239 = vmatpush1.msra.mxu0 %v2167
    %2240 = vmatprep.subr.mxu0 0.0
    %2241 = vmatpush1.msra.mxu0 %v2166
    %2242 = vmatprep.subr.mxu0 0.0
    %2243 = vmatpush2.msra.mxu0 0.0
    %2244 = vmatprep.subr.mxu0 0.0
    %2245 = vmatpush2.msra.mxu0 0.0
    %2246 = vmatprep.subr.mxu0 0.0
    %2247 = vmatpush2.msra.mxu0 0.0
    %2248 = vmatprep.subr.mxu0 0.0
    %2249 = vmatpush2.msra.mxu0 0.0
    %2250 = vmatprep.subr.mxu0 0.0
    %2251 = vmatpush2.msra.mxu0 0.0
    %2252 = vmatprep.subr.mxu0 0.0
    %2253 = vmatpush2.msra.mxu0 0.0
    %2254 = vmatprep.subr.mxu0 0.0
    %2255 = vmatpush2.msra.mxu0 0.0
    %2256 = vmatprep.subr.mxu0 0.0
    %2257 = vmatpush2.msra.mxu0 0.0
    %2258 = vmatprep.subr.mxu0 0.0
    %2259 = vmatpush2.msra.mxu0 %v2189
    %2260 = vmatprep.subr.mxu0 0.0
    %2261 = vmatpush2.msra.mxu0 %v2188
    %2262 = vmatprep.subr.mxu0 0.0
    %2263 = vmatpush2.msra.mxu0 %v2187
    %2264 = vmatprep.subr.mxu0 0.0
    %2265 = vmatpush2.msra.mxu0 %v2186
    %2266 = vmatprep.subr.mxu0 0.0
    %2267 = vmatpush2.msra.mxu0 %v2185
    %2268 = vmatprep.subr.mxu0 0.0
    %2269 = vmatpush2.msra.mxu0 %v2184
    %2270 = vmatprep.subr.mxu0 0.0
    %2271 = vmatpush2.msra.mxu0 %v2183
    %2272 = vmatprep.subr.mxu0 0.0
    %2273 = vmatpush2.msra.mxu0 %v2182
    %2274 = vmatprep.mubr.f32.mxu0 %v2199
    %2275 = vmatmul.mubr.f32.gmra.mxu0 %v2161
    %v2276 = vpop.f32.mrf.mxu0
    %v2277 = vadd.f32 %v2196, %v2276
    %v2278 = vpop.f32.mrf.mxu0
    %2279 = vmatprep.mubr.f32.mxu0 %v2202
    %2280 = vmatmul.mubr.f32.gmra.mxu0 %v2162
    %v2281 = vpop.f32.mrf.mxu0
    %v2282 = vadd.f32 %v2196, %v2281
    %v2283 = vpop.f32.mrf.mxu0
    %2284 = vmatprep.mubr.f32.mxu0 %v2205
    %2285 = vmatmul.mubr.f32.gmra.mxu0 %v2163
    %v2286 = vpop.f32.mrf.mxu0
    %v2287 = vadd.f32 %v2196, %v2286
    %v2288 = vpop.f32.mrf.mxu0
    %2289 = vmatprep.mubr.f32.mxu0 %v2208
    %2290 = vmatmul.mubr.f32.gmra.mxu0 %v2164
    %v2291 = vpop.f32.mrf.mxu0
    %v2292 = vadd.f32 %v2196, %v2291
    %v2293 = vpop.f32.mrf.mxu0
    %2294 = vdwg.mxu0
    %v2295 = vmul.f32 %v2277, %v2277
    %v2296 = vmul.f32 %v2282, %v2282
    %v2297 = vmul.f32 %v2287, %v2287
    %v2298 = vmul.f32 %v2292, %v2292
    %2303 = vrot.lane.b32.xlu0 %v2295, 64
    %v2304 = vpop.permute.xlu0 %2303
    %2305 = vrot.lane.b32.xlu0 %v2296, 64
    %v2306 = vpop.permute.xlu0 %2305
    %2307 = vrot.lane.b32.xlu0 %v2297, 64
    %v2308 = vpop.permute.xlu0 %2307
    %2309 = vrot.lane.b32.xlu0 %v2298, 64
    %v2310 = vpop.permute.xlu0 %2309
    %v2315 = vsel %vm324, %v2277, %v2304
    %v2316 = vsel %vm324, %v2282, %v2306
    %v2317 = vsel %vm324, %v2287, %v2308
    %v2318 = vsel %vm324, %v2292, %v2310
    %2319 = vmatprep.subr.mxu0 0.0
    %2320 = vmatpush1.msra.mxu0 %v172
    %2321 = vmatprep.subr.mxu0 0.0
    %2322 = vmatpush1.msra.mxu0 %v171
    %2323 = vmatprep.subr.mxu0 0.0
    %2324 = vmatpush1.msra.mxu0 %v170
    %2325 = vmatprep.subr.mxu0 0.0
    %2326 = vmatpush1.msra.mxu0 %v169
    %2327 = vmatprep.subr.mxu0 0.0
    %2328 = vmatpush1.msra.mxu0 %v168
    %2329 = vmatprep.subr.mxu0 0.0
    %2330 = vmatpush1.msra.mxu0 %v167
    %2331 = vmatprep.subr.mxu0 0.0
    %2332 = vmatpush1.msra.mxu0 %v166
    %2333 = vmatprep.subr.mxu0 0.0
    %2334 = vmatpush1.msra.mxu0 %v165
    %2335 = vmatprep.subr.mxu0 0.0
    %2336 = vmatpush1.msra.mxu0 %v164
    %2337 = vmatprep.subr.mxu0 0.0
    %2338 = vmatpush1.msra.mxu0 %v163
    %2339 = vmatprep.subr.mxu0 0.0
    %2340 = vmatpush1.msra.mxu0 %v162
    %2341 = vmatprep.subr.mxu0 0.0
    %2342 = vmatpush1.msra.mxu0 %v161
    %2343 = vmatprep.subr.mxu0 0.0
    %2344 = vmatpush1.msra.mxu0 %v160
    %2345 = vmatprep.subr.mxu0 0.0
    %2346 = vmatpush1.msra.mxu0 %v159
    %2347 = vmatprep.subr.mxu0 0.0
    %2348 = vmatpush1.msra.mxu0 %v158
    %2349 = vmatprep.subr.mxu0 0.0
    %2350 = vmatpush1.msra.mxu0 %v157
    %2351 = vmatprep.subr.mxu0 0.0
    %2352 = vmatpush2.msra.mxu0 0.0
    %2353 = vmatprep.subr.mxu0 0.0
    %2354 = vmatpush2.msra.mxu0 0.0
    %2355 = vmatprep.subr.mxu0 0.0
    %2356 = vmatpush2.msra.mxu0 0.0
    %2357 = vmatprep.subr.mxu0 0.0
    %2358 = vmatpush2.msra.mxu0 0.0
    %2359 = vmatprep.subr.mxu0 0.0
    %2360 = vmatpush2.msra.mxu0 0.0
    %2361 = vmatprep.subr.mxu0 0.0
    %2362 = vmatpush2.msra.mxu0 0.0
    %2363 = vmatprep.subr.mxu0 0.0
    %2364 = vmatpush2.msra.mxu0 0.0
    %2365 = vmatprep.subr.mxu0 0.0
    %2366 = vmatpush2.msra.mxu0 0.0
    %2367 = vmatprep.subr.mxu0 0.0
    %2368 = vmatpush2.msra.mxu0 0.0
    %2369 = vmatprep.subr.mxu0 0.0
    %2370 = vmatpush2.msra.mxu0 0.0
    %2371 = vmatprep.subr.mxu0 0.0
    %2372 = vmatpush2.msra.mxu0 0.0
    %2373 = vmatprep.subr.mxu0 0.0
    %2374 = vmatpush2.msra.mxu0 0.0
    %2375 = vmatprep.subr.mxu0 0.0
    %2376 = vmatpush2.msra.mxu0 0.0
    %2377 = vmatprep.subr.mxu0 0.0
    %2378 = vmatpush2.msra.mxu0 0.0
    %2379 = vmatprep.subr.mxu0 0.0
    %2380 = vmatpush2.msra.mxu0 0.0
    %2381 = vmatprep.subr.mxu0 0.0
    %2382 = vmatpush2.msra.mxu0 0.0
    %2383 = vmatprep.mubr.f32.mxu0 0.0
    %2384 = vmatmul.mubr.f32.gmra.mxu0 %v2315
    %v2385 = vpop.f32.mrf.mxu0
    %v2386 = vadd.f32 0.0, %v2385
    %v2387 = vpop.f32.mrf.mxu0
    %2388 = vmatprep.mubr.f32.mxu0 0.0
    %2389 = vmatmul.mubr.f32.gmra.mxu0 %v2316
    %v2390 = vpop.f32.mrf.mxu0
    %v2391 = vadd.f32 0.0, %v2390
    %v2392 = vpop.f32.mrf.mxu0
    %2393 = vmatprep.mubr.f32.mxu0 0.0
    %2394 = vmatmul.mubr.f32.gmra.mxu0 %v2317
    %v2395 = vpop.f32.mrf.mxu0
    %v2396 = vadd.f32 0.0, %v2395
    %v2397 = vpop.f32.mrf.mxu0
    %2398 = vmatprep.mubr.f32.mxu0 0.0
    %2399 = vmatmul.mubr.f32.gmra.mxu0 %v2318
    %v2400 = vpop.f32.mrf.mxu0
    %v2401 = vadd.f32 0.0, %v2400
    %v2402 = vpop.f32.mrf.mxu0
    %2403 = vdwg.mxu0
    %v2404 = vmul.f32 %v2386, %v2386
    %v2405 = vmul.f32 %v2391, %v2391
    %v2406 = vmul.f32 %v2396, %v2396
    %v2407 = vmul.f32 %v2401, %v2401
    %2412 = vrot.lane.b32.xlu0 %v2404, 64
    %v2413 = vpop.permute.xlu0 %2412
    %2414 = vrot.lane.b32.xlu0 %v2405, 64
    %v2415 = vpop.permute.xlu0 %2414
    %2416 = vrot.lane.b32.xlu0 %v2406, 64
    %v2417 = vpop.permute.xlu0 %2416
    %2418 = vrot.lane.b32.xlu0 %v2407, 64
    %v2419 = vpop.permute.xlu0 %2418
    %v2424 = vsub.f32 %v2386, %v2413
    %v2425 = vsub.f32 %v2391, %v2415
    %v2426 = vsub.f32 %v2396, %v2417
    %v2427 = vsub.f32 %v2401, %v2419
    %v2428 = vmax.f32 %v2424, 0.0
    %v2429 = vmax.f32 %v2425, 0.0
    %v2430 = vmax.f32 %v2426, 0.0
    %v2431 = vmax.f32 %v2427, 0.0
    %v2432 = vsub.f32 %v2277, %v2386
    %v2433 = vsub.f32 %v2282, %v2391
    %v2434 = vsub.f32 %v2287, %v2396
    %v2435 = vsub.f32 %v2292, %v2401
    %v2436 = vadd.f32 %v2428, 1e-08
    %v2437 = vadd.f32 %v2429, 1e-08
    %v2438 = vadd.f32 %v2430, 1e-08
    %v2439 = vadd.f32 %v2431, 1e-08
    %v2440 = vrsqrt.pop %v2436
    %v2441 = vrsqrt.pop %v2437
    %v2442 = vrsqrt.pop %v2438
    %v2443 = vrsqrt.pop %v2439
    %2448 = vrot.lane.b32.xlu0 %v2440, 64
    %v2449 = vpop.permute.xlu0 %2448
    %2450 = vrot.lane.b32.xlu0 %v2441, 64
    %v2451 = vpop.permute.xlu0 %2450
    %2452 = vrot.lane.b32.xlu0 %v2442, 64
    %v2453 = vpop.permute.xlu0 %2452
    %2454 = vrot.lane.b32.xlu0 %v2443, 64
    %v2455 = vpop.permute.xlu0 %2454
    %v2460 = vmul.f32 %v2432, %v2449
    %v2461 = vmul.f32 %v2433, %v2451
    %v2462 = vmul.f32 %v2434, %v2453
    %v2463 = vmul.f32 %v2435, %v2455
    %s2464 = scalar_lea.vmem %s5, 5
    %v2465 = vld [vmem:[%s2464] sm:$0x1]
    %v2467 = vlaneseq
    %v2468 = vshrl.u32 %v2467, 7
    %v2469 = vsub.s32 0, %v2468
    %v2470 = vrot.slane %v2465, %v2469
    %v2472 = vmul.f32 %v2460, %v2470
    %v2473 = vmul.f32 %v2461, %v2470
    %v2474 = vmul.f32 %v2462, %v2470
    %v2475 = vmul.f32 %v2463, %v2470
    %s2476 = scalar_lea.vmem %s6, 5
    %v2477 = vld [vmem:[%s2476] sm:$0x1]
    %v2479 = vlaneseq
    %v2480 = vshrl.u32 %v2479, 7
    %v2481 = vsub.s32 0, %v2480
    %v2482 = vrot.slane %v2477, %v2481
    %v2484 = vadd.f32 %v2472, %v2482
    %v2485 = vadd.f32 %v2473, %v2482
    %v2486 = vadd.f32 %v2474, %v2482
    %v2487 = vadd.f32 %v2475, %v2482
    %v2488 = vmax.f32 %v2484, 0.0
    %v2489 = vmax.f32 %v2485, 0.0
    %v2490 = vmax.f32 %v2486, 0.0
    %v2491 = vmax.f32 %v2487, 0.0
    %s2492 = sld [smem:[#allocation2 + $0x2]]
    %v2493 = vstv %s2492
    %v2494 = vmul.f32 %v2493, %v2488
    %v2495 = vmul.f32 %v2493, %v2489
    %v2496 = vmul.f32 %v2493, %v2490
    %v2497 = vmul.f32 %v2493, %v2491
    %v2498 = vadd.f32 %v2494, %v1774
    %v2499 = vadd.f32 %v2495, %v1775
    %v2500 = vadd.f32 %v2496, %v1776
    %v2501 = vadd.f32 %v2497, %v1777
    %v2502 = vld [vmem:[%s8] sm:$0xff]
    %v2503 = vld [vmem:[%s8 + $0x8] sm:$0xff]
    %v2504 = vld [vmem:[%s8 + $0x10] sm:$0xff]
    %v2505 = vld [vmem:[%s8 + $0x18] sm:$0xff]
    %v2506 = vld [vmem:[%s8 + $0x20] sm:$0xff]
    %v2507 = vld [vmem:[%s8 + $0x28] sm:$0xff]
    %v2508 = vld [vmem:[%s8 + $0x30] sm:$0xff]
    %v2509 = vld [vmem:[%s8 + $0x38] sm:$0xff]
    %v2510 = vld [vmem:[%s9] sm:$0x1]
    %v2512 = vlaneseq
    %v2513 = vshrl.u32 %v2512, 7
    %v2514 = vsub.s32 0, %v2513
    %v2515 = vrot.slane %v2510, %v2514
    %v2518 = vsel %vm324, %v2498, 0
    %v2521 = vsel %vm324, %v2499, 0
    %v2524 = vsel %vm324, %v2500, 0
    %v2527 = vsel %vm324, %v2501, 0
    %2529 = vmatprep.subr.mxu0 0.0
    %2530 = vmatpush1.msra.mxu0 0.0
    %2531 = vmatprep.subr.mxu0 0.0
    %2532 = vmatpush1.msra.mxu0 0.0
    %2533 = vmatprep.subr.mxu0 0.0
    %2534 = vmatpush1.msra.mxu0 0.0
    %2535 = vmatprep.subr.mxu0 0.0
    %2536 = vmatpush1.msra.mxu0 0.0
    %2537 = vmatprep.subr.mxu0 0.0
    %2538 = vmatpush1.msra.mxu0 0.0
    %2539 = vmatprep.subr.mxu0 0.0
    %2540 = vmatpush1.msra.mxu0 0.0
    %2541 = vmatprep.subr.mxu0 0.0
    %2542 = vmatpush1.msra.mxu0 0.0
    %2543 = vmatprep.subr.mxu0 0.0
    %2544 = vmatpush1.msra.mxu0 0.0
    %2545 = vmatprep.subr.mxu0 0.0
    %2546 = vmatpush1.msra.mxu0 %v2509
    %2547 = vmatprep.subr.mxu0 0.0
    %2548 = vmatpush1.msra.mxu0 %v2508
    %2549 = vmatprep.subr.mxu0 0.0
    %2550 = vmatpush1.msra.mxu0 %v2507
    %2551 = vmatprep.subr.mxu0 0.0
    %2552 = vmatpush1.msra.mxu0 %v2506
    %2553 = vmatprep.subr.mxu0 0.0
    %2554 = vmatpush1.msra.mxu0 %v2505
    %2555 = vmatprep.subr.mxu0 0.0
    %2556 = vmatpush1.msra.mxu0 %v2504
    %2557 = vmatprep.subr.mxu0 0.0
    %2558 = vmatpush1.msra.mxu0 %v2503
    %2559 = vmatprep.subr.mxu0 0.0
    %2560 = vmatpush1.msra.mxu0 %v2502
    %2561 = vmatprep.subr.mxu0 0.0
    %2562 = vmatpush2.msra.mxu0 0.0
    %2563 = vmatprep.subr.mxu0 0.0
    %2564 = vmatpush2.msra.mxu0 0.0
    %2565 = vmatprep.subr.mxu0 0.0
    %2566 = vmatpush2.msra.mxu0 0.0
    %2567 = vmatprep.subr.mxu0 0.0
    %2568 = vmatpush2.msra.mxu0 0.0
    %2569 = vmatprep.subr.mxu0 0.0
    %2570 = vmatpush2.msra.mxu0 0.0
    %2571 = vmatprep.subr.mxu0 0.0
    %2572 = vmatpush2.msra.mxu0 0.0
    %2573 = vmatprep.subr.mxu0 0.0
    %2574 = vmatpush2.msra.mxu0 0.0
    %2575 = vmatprep.subr.mxu0 0.0
    %2576 = vmatpush2.msra.mxu0 0.0
    %2577 = vmatprep.subr.mxu0 0.0
    %2578 = vmatpush2.msra.mxu0 0.0
    %2579 = vmatprep.subr.mxu0 0.0
    %2580 = vmatpush2.msra.mxu0 0.0
    %2581 = vmatprep.subr.mxu0 0.0
    %2582 = vmatpush2.msra.mxu0 0.0
    %2583 = vmatprep.subr.mxu0 0.0
    %2584 = vmatpush2.msra.mxu0 0.0
    %2585 = vmatprep.subr.mxu0 0.0
    %2586 = vmatpush2.msra.mxu0 0.0
    %2587 = vmatprep.subr.mxu0 0.0
    %2588 = vmatpush2.msra.mxu0 0.0
    %2589 = vmatprep.subr.mxu0 0.0
    %2590 = vmatpush2.msra.mxu0 0.0
    %2591 = vmatprep.subr.mxu0 0.0
    %2592 = vmatpush2.msra.mxu0 0.0
    %2593 = vmatprep.mubr.f32.mxu0 0.0
    %2594 = vmatmul.mubr.f32.gmra.mxu0 %v2518
    %v2595 = vpop.f32.mrf.mxu0
    %v2596 = vadd.f32 %v2515, %v2595
    %v2597 = vpop.f32.mrf.mxu0
    %2598 = vmatprep.mubr.f32.mxu0 0.0
    %2599 = vmatmul.mubr.f32.gmra.mxu0 %v2521
    %v2600 = vpop.f32.mrf.mxu0
    %v2601 = vadd.f32 %v2515, %v2600
    %v2602 = vpop.f32.mrf.mxu0
    %2603 = vmatprep.mubr.f32.mxu0 0.0
    %2604 = vmatmul.mubr.f32.gmra.mxu0 %v2524
    %v2605 = vpop.f32.mrf.mxu0
    %v2606 = vadd.f32 %v2515, %v2605
    %v2607 = vpop.f32.mrf.mxu0
    %2608 = vmatprep.mubr.f32.mxu0 0.0
    %2609 = vmatmul.mubr.f32.gmra.mxu0 %v2527
    %v2610 = vpop.f32.mrf.mxu0
    %v2611 = vadd.f32 %v2515, %v2610
    %v2612 = vpop.f32.mrf.mxu0
    %2613 = vdwg.mxu0
    %2614 = vst [vmem:[#allocation5] sm:$0xff] %v2596
    %2615 = vst [vmem:[#allocation5 + $0x8] sm:$0xff] %v2601
    %2616 = vst [vmem:[#allocation5 + $0x10] sm:$0xff] %v2606
    %2617 = vst [vmem:[#allocation5 + $0x18] sm:$0xff] %v2611
    // Predicated region
    $region50: #{tpu_custom_call.1} parent=1 // pred_check
      _
    $region51: #{tpu_custom_call.1} parent=1 // pred_check_branch
      %2619 = sbr.rel (0) target = $region53
    $region52: #{tpu_custom_call.1} parent=1 // pred_region
      %s2621 = ssub.s32 512, 512
      %2622 = vsyncadd [#allocation3], %s2621
      %s2623 = sshll.u32 [#allocation5], 4
      %s2624 = int_to_ptr.vmem [resolvable:$true] %s2623
      %2629 = dma.vmem_to_hbm [thread:$0]  %s2624, 512, %s11, [#allocation3], 128, 128, 8
    $region53: #{tpu_custom_call.1} parent=1 // pred_fallthru
      _
    // Predicated region
    $region54: #{tpu_custom_call.1} parent=1 // pred_check
      _
    $region55: #{tpu_custom_call.1} parent=1 // pred_check_branch
      %2631 = sbr.rel (0) target = $region57
    $region56: #{tpu_custom_call.1} parent=1 // pred_region
      %2632 = dma.done [#allocation3], 512
    $region57: #{tpu_custom_call.1} parent=1 // pred_fallthru
      _
    %2633 = vsyncpa [#allocation3], 1
    %2634 = vsyncpa [#allocation4], 1

</llo_original>
